<compile_context>
chip_gen: v6e
topology: v6e:2x2x1
jax: 0.10.0
libtpu: 0.0.40
codegen_flags: <defaults>
</compile_context>

<pallas_src>
import jax
import jax.numpy as jnp
from jax.experimental import pallas as pl
from jax.experimental.pallas import tpu as pltpu

IN_DIM = 28 * 28          # 784
H1_DIM = 500
H1_PAD = 512              # 500 padded to 512
H2_DIM = 256
OUT_DIM = 10
OUT_PAD = 128             # 10 padded to 128
TB_MAX = 512              # batch-tile cap (review: 512-1024; 512 keeps VMEM ~few MiB)


def _round_up(x, m):
    return ((x + m - 1) // m) * m


def mlp_kernel(x_ref, w1_ref, b1_ref, w2_ref, b2_ref, w3_ref, b3_ref, o_ref):
    # One batch tile per grid step; all three matmuls + ReLUs fused on-chip.
    # x arrives as f32 (single HBM pass); cast to bf16 on the VPU for the MXU.
    x = x_ref[...].astype(jnp.bfloat16)                       # (TB, 784)
    h1 = jnp.dot(x, w1_ref[...], preferred_element_type=jnp.float32) + b1_ref[...]
    h1 = jnp.maximum(h1.astype(jnp.bfloat16), 0.0)            # bf16 epilogue
    h2 = jnp.dot(h1, w2_ref[...], preferred_element_type=jnp.float32) + b2_ref[...]
    h2 = jnp.maximum(h2.astype(jnp.bfloat16), 0.0)
    o_ref[...] = (jnp.dot(h2, w3_ref[...], preferred_element_type=jnp.float32)
                  + b3_ref[...])                              # f32 (TB, 128)


def mlp_forward(x, params, tb_max=TB_MAX):
    """x: (B, 1, 28, 28) or (B, 784) float32. Returns (B, 10) float32."""
    w1, b1, w2, b2, w3, b3 = params  # already padded / bf16 (see prepare_params)
    x2d = x.reshape(-1, IN_DIM)
    if x2d.dtype != jnp.float32:
        x2d = x2d.astype(jnp.float32)
    B = x2d.shape[0]

    # Right-size the batch tile at 128-row granularity; for larger batches make
    # sure there are >= 2 grid steps so v7x's second TensorCore gets work.
    b_aligned = _round_up(max(B, 1), 128)
    tb = min(tb_max, b_aligned)
    if b_aligned >= 256 and pl.cdiv(b_aligned, tb) < 2:
        tb = _round_up(pl.cdiv(b_aligned, 2), 128)
    n_tiles = pl.cdiv(B, tb)
    B_pad = n_tiles * tb
    if B_pad != B:
        x2d = jnp.pad(x2d, ((0, B_pad - B), (0, 0)))

    # Weights/biases: constant block index -> VMEM-resident (no re-DMA); single
    # pipeline buffer since the block never changes.
    def resident(shape):
        return pl.BlockSpec(shape, lambda i: (0, 0), pipeline_mode=pl.Buffered(1))

    flops = 2 * B_pad * (IN_DIM * H1_PAD + H1_PAD * H2_DIM + H2_DIM * OUT_PAD)
    bytes_accessed = (
        x2d.size * 4                                   # f32 activations in
        + (w1.size + w2.size + w3.size) * 2            # bf16 weights
        + (b1.size + b2.size + b3.size) * 4            # f32 biases
        + B_pad * OUT_PAD * 4                          # f32 output
    )

    out = pl.pallas_call(
        mlp_kernel,
        out_shape=jax.ShapeDtypeStruct((B_pad, OUT_PAD), jnp.float32),
        grid=(n_tiles,),
        in_specs=[
            pl.BlockSpec((tb, IN_DIM), lambda i: (i, 0)),   # x: streamed per tile
            resident((IN_DIM, H1_PAD)), resident((1, H1_PAD)),
            resident((H1_PAD, H2_DIM)), resident((1, H2_DIM)),
            resident((H2_DIM, OUT_PAD)), resident((1, OUT_PAD)),
        ],
        out_specs=pl.BlockSpec((tb, OUT_PAD), lambda i: (i, 0)),
        compiler_params=pltpu.CompilerParams(
            dimension_semantics=("parallel",)),
        cost_estimate=pl.CostEstimate(
            flops=flops, transcendentals=0, bytes_accessed=bytes_accessed),
    )(x2d, w1, b1, w2, b2, w3, b3)

    return out[:B, :OUT_DIM]


def init_params(key):
    """Deterministic f32 params matching nn.Linear shapes (stored as (in, out))."""
    ks = jax.random.split(key, 6)

    def linear(kw, kb, fan_in, fan_out):
        bound = 1.0 / jnp.sqrt(fan_in)
        w = jax.random.uniform(kw, (fan_in, fan_out), jnp.float32, -bound, bound)
        b = jax.random.uniform(kb, (1, fan_out), jnp.float32, -bound, bound)
        return w, b

    w1, b1 = linear(ks[0], ks[1], IN_DIM, H1_DIM)
    w2, b2 = linear(ks[2], ks[3], H1_DIM, H2_DIM)
    w3, b3 = linear(ks[4], ks[5], H2_DIM, OUT_DIM)
    return (w1, b1, w2, b2, w3, b3)


def prepare_params(params):
    """Pad 500->512 and 10->128 (zeros), cast weights to bf16, biases stay f32."""
    w1, b1, w2, b2, w3, b3 = params
    w1p = jnp.pad(w1, ((0, 0), (0, H1_PAD - H1_DIM))).astype(jnp.bfloat16)
    b1p = jnp.pad(b1, ((0, 0), (0, H1_PAD - H1_DIM)))
    w2p = jnp.pad(w2, ((0, H1_PAD - H1_DIM), (0, 0))).astype(jnp.bfloat16)
    b2p = b2
    w3p = jnp.pad(w3, ((0, 0), (0, OUT_PAD - OUT_DIM))).astype(jnp.bfloat16)
    b3p = jnp.pad(b3, ((0, 0), (0, OUT_PAD - OUT_DIM)))
    return (w1p, b1p, w2p, b2p, w3p, b3p)


if __name__ == "__main__":
    key = jax.random.PRNGKey(0)
    kx, kp = jax.random.split(key)
    # Small MNIST-like batch: (B=8, C=1, H=28, W=28), NCHW.
    x = jax.random.normal(kx, (8, 1, 28, 28), jnp.float32)
    params = prepare_params(init_params(kp))

    out = mlp_forward(x, params)
    jax.block_until_ready(out)

    # Plain-JAX reference with the same bf16 weights / f32 accumulation.
    w1, b1, w2, b2, w3, b3 = params
    xb = x.reshape(-1, IN_DIM).astype(jnp.bfloat16)
    h1 = jnp.dot(xb, w1, preferred_element_type=jnp.float32) + b1
    h1 = jnp.maximum(h1.astype(jnp.bfloat16), 0.0)
    h2 = jnp.dot(h1, w2, preferred_element_type=jnp.float32) + b2
    h2 = jnp.maximum(h2.astype(jnp.bfloat16), 0.0)
    ref = (jnp.dot(h2, w3, preferred_element_type=jnp.float32) + b3)[:, :OUT_DIM]

    assert out.shape == (8, OUT_DIM)
    assert jnp.allclose(out, ref, atol=1e-2, rtol=1e-2), (
        float(jnp.max(jnp.abs(out - ref))))
    print("KERNEL_OK")
</pallas_src>

<mosaic_0001>
module attributes {stable_mosaic.version = 11 : i64} {
  func.func @mlp_kernel(%arg0: i32, %arg1: memref<128x784xf32, #tpu.memory_space<vmem>>, %arg2: memref<784x512xbf16, #tpu.memory_space<vmem>>, %arg3: memref<1x512xf32, #tpu.memory_space<vmem>>, %arg4: memref<512x256xbf16, #tpu.memory_space<vmem>>, %arg5: memref<1x256xf32, #tpu.memory_space<vmem>>, %arg6: memref<256x128xbf16, #tpu.memory_space<vmem>>, %arg7: memref<1x128xf32, #tpu.memory_space<vmem>>, %arg8: memref<128x128xf32, #tpu.memory_space<vmem>>) attributes {dimension_semantics = [#tpu.dimension_semantics<parallel>], iteration_bounds = array<i64: 1>, scalar_prefetch = 0 : i64, scratch_operands = 0 : i64, tpu.core_type = #tpu.core_type<tc>, window_params = [{transform_indices = @transform_0, window_bounds = array<i64: 128, 784>}, {pipeline_mode = #tpu.pipeline_mode<synchronous>, transform_indices = @transform_1, window_bounds = array<i64: 784, 512>}, {pipeline_mode = #tpu.pipeline_mode<synchronous>, transform_indices = @transform_2, window_bounds = array<i64: 1, 512>}, {pipeline_mode = #tpu.pipeline_mode<synchronous>, transform_indices = @transform_3, window_bounds = array<i64: 512, 256>}, {pipeline_mode = #tpu.pipeline_mode<synchronous>, transform_indices = @transform_4, window_bounds = array<i64: 1, 256>}, {pipeline_mode = #tpu.pipeline_mode<synchronous>, transform_indices = @transform_5, window_bounds = array<i64: 256, 128>}, {pipeline_mode = #tpu.pipeline_mode<synchronous>, transform_indices = @transform_6, window_bounds = array<i64: 1, 128>}, {transform_indices = @transform_7, window_bounds = array<i64: 128, 128>}]} {
    %c0 = arith.constant 0 : index
    %c0_0 = arith.constant 0 : index
    %0 = vector.load %arg1[%c0, %c0_0] : memref<128x784xf32, #tpu.memory_space<vmem>>, vector<128x784xf32>
    %1 = arith.truncf %0 : vector<128x784xf32> to vector<128x784xbf16>
    %c0_1 = arith.constant 0 : index
    %c0_2 = arith.constant 0 : index
    %2 = vector.load %arg2[%c0_1, %c0_2] : memref<784x512xbf16, #tpu.memory_space<vmem>>, vector<784x512xbf16>
    %cst = arith.constant dense<0.000000e+00> : vector<128x512xf32>
    %3 = tpu.matmul %1, %2, %cst {dimension_numbers = #tpu.dot_dimension_numbers<[1], [0], [0], [1], [0, 0, 1, 1], [], []>} : vector<128x784xbf16>, vector<784x512xbf16>, vector<128x512xf32> -> vector<128x512xf32>
    %c0_3 = arith.constant 0 : index
    %c0_4 = arith.constant 0 : index
    %4 = vector.load %arg3[%c0_3, %c0_4] : memref<1x512xf32, #tpu.memory_space<vmem>>, vector<1x512xf32>
    %5 = vector.broadcast %4 : vector<1x512xf32> to vector<128x512xf32>
    %6 = arith.addf %3, %5 : vector<128x512xf32>
    %7 = arith.truncf %6 : vector<128x512xf32> to vector<128x512xbf16>
    %cst_5 = arith.constant 0.000000e+00 : bf16
    %8 = vector.broadcast %cst_5 : bf16 to vector<128x512xbf16>
    %9 = arith.maximumf %7, %8 : vector<128x512xbf16>
    %c0_6 = arith.constant 0 : index
    %c0_7 = arith.constant 0 : index
    %10 = vector.load %arg4[%c0_6, %c0_7] : memref<512x256xbf16, #tpu.memory_space<vmem>>, vector<512x256xbf16>
    %cst_8 = arith.constant dense<0.000000e+00> : vector<128x256xf32>
    %11 = tpu.matmul %9, %10, %cst_8 {dimension_numbers = #tpu.dot_dimension_numbers<[1], [0], [0], [1], [0, 0, 1, 1], [], []>} : vector<128x512xbf16>, vector<512x256xbf16>, vector<128x256xf32> -> vector<128x256xf32>
    %c0_9 = arith.constant 0 : index
    %c0_10 = arith.constant 0 : index
    %12 = vector.load %arg5[%c0_9, %c0_10] : memref<1x256xf32, #tpu.memory_space<vmem>>, vector<1x256xf32>
    %13 = vector.broadcast %12 : vector<1x256xf32> to vector<128x256xf32>
    %14 = arith.addf %11, %13 : vector<128x256xf32>
    %15 = arith.truncf %14 : vector<128x256xf32> to vector<128x256xbf16>
    %cst_11 = arith.constant 0.000000e+00 : bf16
    %16 = vector.broadcast %cst_11 : bf16 to vector<128x256xbf16>
    %17 = arith.maximumf %15, %16 : vector<128x256xbf16>
    %c0_12 = arith.constant 0 : index
    %c0_13 = arith.constant 0 : index
    %18 = vector.load %arg6[%c0_12, %c0_13] : memref<256x128xbf16, #tpu.memory_space<vmem>>, vector<256x128xbf16>
    %cst_14 = arith.constant dense<0.000000e+00> : vector<128x128xf32>
    %19 = tpu.matmul %17, %18, %cst_14 {dimension_numbers = #tpu.dot_dimension_numbers<[1], [0], [0], [1], [0, 0, 1, 1], [], []>} : vector<128x256xbf16>, vector<256x128xbf16>, vector<128x128xf32> -> vector<128x128xf32>
    %c0_15 = arith.constant 0 : index
    %c0_16 = arith.constant 0 : index
    %20 = vector.load %arg7[%c0_15, %c0_16] : memref<1x128xf32, #tpu.memory_space<vmem>>, vector<1x128xf32>
    %21 = vector.broadcast %20 : vector<1x128xf32> to vector<128x128xf32>
    %22 = arith.addf %19, %21 : vector<128x128xf32>
    %c0_17 = arith.constant 0 : index
    %c0_18 = arith.constant 0 : index
    %23 = vector.load %arg8[%c0_17, %c0_18] : memref<128x128xf32, #tpu.memory_space<vmem>>, vector<128x128xf32>
    tpu.vector_store %arg8[%c0_17, %c0_18], %22 {strides = array<i32>} : memref<128x128xf32, #tpu.memory_space<vmem>>, vector<128x128xf32>,
    return
  }
  func.func @transform_0(%arg0: i32) -> (i32, i32) {
    %c0_i32 = arith.constant 0 : i32
    %c0_i32_0 = arith.constant 0 : i32
    return %arg0, %c0_i32 : i32, i32
  }
  func.func @transform_1(%arg0: i32) -> (i32, i32) {
    %c0_i32 = arith.constant 0 : i32
    %c0_i32_0 = arith.constant 0 : i32
    %c0_i32_1 = arith.constant 0 : i32
    return %c0_i32, %c0_i32_0 : i32, i32
  }
  func.func @transform_2(%arg0: i32) -> (i32, i32) {
    %c0_i32 = arith.constant 0 : i32
    %c0_i32_0 = arith.constant 0 : i32
    %c0_i32_1 = arith.constant 0 : i32
    return %c0_i32, %c0_i32_0 : i32, i32
  }
  func.func @transform_3(%arg0: i32) -> (i32, i32) {
    %c0_i32 = arith.constant 0 : i32
    %c0_i32_0 = arith.constant 0 : i32
    %c0_i32_1 = arith.constant 0 : i32
    return %c0_i32, %c0_i32_0 : i32, i32
  }
  func.func @transform_4(%arg0: i32) -> (i32, i32) {
    %c0_i32 = arith.constant 0 : i32
    %c0_i32_0 = arith.constant 0 : i32
    %c0_i32_1 = arith.constant 0 : i32
    return %c0_i32, %c0_i32_0 : i32, i32
  }
  func.func @transform_5(%arg0: i32) -> (i32, i32) {
    %c0_i32 = arith.constant 0 : i32
    %c0_i32_0 = arith.constant 0 : i32
    %c0_i32_1 = arith.constant 0 : i32
    return %c0_i32, %c0_i32_0 : i32, i32
  }
  func.func @transform_6(%arg0: i32) -> (i32, i32) {
    %c0_i32 = arith.constant 0 : i32
    %c0_i32_0 = arith.constant 0 : i32
    %c0_i32_1 = arith.constant 0 : i32
    return %c0_i32, %c0_i32_0 : i32, i32
  }
  func.func @transform_7(%arg0: i32) -> (i32, i32) {
    %c0_i32 = arith.constant 0 : i32
    %c0_i32_0 = arith.constant 0 : i32
    return %arg0, %c0_i32 : i32, i32
  }
}

</mosaic_0001>

<llo_original>
// kernel: tpu_custom_call.1
$region0: #{tpu_custom_call.1}
  #allocation0 [shape = 'u32[]', space=smem, size = 0x4, offset = 0x4, fixed_abs, tag = 'smem constant byte address 0x4 - core index']
  #allocation1 [shape = 'u32[144,128]{1,0:T(1,128)}', space=vmem, size = 0x12000, scoped, tag = 'internal scratch']
  %s0 = inlined_call_operand.vmem [shape: f32[128,784], index: 0, kind: input, shape index: {}]
  %s1 = inlined_call_operand.vmem [shape: bf16[784,512], index: 1, kind: input, shape index: {}]
  %s2 = inlined_call_operand.vmem [shape: f32[1,512], index: 2, kind: input, shape index: {}]
  %s3 = inlined_call_operand.hbm [shape: bf16[512,256], index: 3, kind: input, shape index: {}]
  %s4 = inlined_call_operand.vmem [shape: f32[1,256], index: 4, kind: input, shape index: {}]
  %s5 = inlined_call_operand.hbm [shape: bf16[256,128], index: 5, kind: input, shape index: {}]
  %s6 = inlined_call_operand.vmem [shape: f32[1,128], index: 6, kind: input, shape index: {}]
  %s7 = inlined_call_operand.hbm [shape: f32[128,128], index: 7, kind: output, shape index: {}]
  %s8 = sld [smem:[#allocation0]]
  $region46: #{tpu_custom_call.1} parent=0
    _
  %s10 = ssub.s32 1, %s8
  %s11 = scalar_select 0, %s10, %s8
  $region1: #{tpu_custom_call.1} parent=0
    #allocation2 [shape = 'u8[262144]{0}', space=vmem, size = 0x40000, scoped, tag = 'input window, operand 3, single buffered']
    #allocation3 [shape = 's32[1]{0}', space=sflag, size = 0x4, scoped, tag = 'scoped memory for tpu_custom_call.1']
    #allocation4 [shape = 's32[1]{0}', space=sflag, size = 0x4, scoped, tag = 'scoped memory for tpu_custom_call.1']
    #allocation5 [shape = 'u8[65536]{0}', space=vmem, size = 0x10000, scoped, tag = 'input window, operand 5, single buffered']
    #allocation6 [shape = 's32[1]{0}', space=sflag, size = 0x4, scoped, tag = 'scoped memory for tpu_custom_call.1']
    #allocation7 [shape = 'u8[65536]{0}', space=vmem, size = 0x10000, scoped, tag = 'output window, operand 0, single buffered']
    %12 = vsyncpa [#allocation3], 0
    %13 = vsyncpa [#allocation6], 0
    %14 = vsyncpa [#allocation4], 0
    // Predicated region
    $region2: #{tpu_custom_call.1} parent=1 // pred_check
      _
    $region3: #{tpu_custom_call.1} parent=1 // pred_check_branch
      %16 = sbr.rel (0) target = $region5
    $region4: #{tpu_custom_call.1} parent=1 // pred_region
      _
    $region5: #{tpu_custom_call.1} parent=1 // pred_fallthru
      _
    // Predicated region
    $region6: #{tpu_custom_call.1} parent=1 // pred_check
      _
    $region7: #{tpu_custom_call.1} parent=1 // pred_check_branch
      %18 = sbr.rel (0) target = $region9
    $region8: #{tpu_custom_call.1} parent=1 // pred_region
      _
    $region9: #{tpu_custom_call.1} parent=1 // pred_fallthru
      _
    // Predicated region
    $region10: #{tpu_custom_call.1} parent=1 // pred_check
      _
    $region11: #{tpu_custom_call.1} parent=1 // pred_check_branch
      %20 = sbr.rel (0) target = $region13
    $region12: #{tpu_custom_call.1} parent=1 // pred_region
      _
    $region13: #{tpu_custom_call.1} parent=1 // pred_fallthru
      _
    // Predicated region
    $region14: #{tpu_custom_call.1} parent=1 // pred_check
      _
    $region15: #{tpu_custom_call.1} parent=1 // pred_check_branch
      %22 = sbr.rel (0) target = $region17
    $region16: #{tpu_custom_call.1} parent=1 // pred_region
      %s24 = ssub.s32 8192, 8192
      %25 = vsyncadd [#allocation3], %s24
      %s26 = sshll.u32 [#allocation2], 4
      %s27 = int_to_ptr.vmem [resolvable:$true] %s26
      %32 = dma.hbm_to_vmem [thread:$0]  %s3, 8192, %s27, [#allocation3], 128, 128, 8
    $region17: #{tpu_custom_call.1} parent=1 // pred_fallthru
      _
    // Predicated region
    $region18: #{tpu_custom_call.1} parent=1 // pred_check
      _
    $region19: #{tpu_custom_call.1} parent=1 // pred_check_branch
      %34 = sbr.rel (0) target = $region21
    $region20: #{tpu_custom_call.1} parent=1 // pred_region
      _
    $region21: #{tpu_custom_call.1} parent=1 // pred_fallthru
      _
    // Predicated region
    $region22: #{tpu_custom_call.1} parent=1 // pred_check
      _
    $region23: #{tpu_custom_call.1} parent=1 // pred_check_branch
      %36 = sbr.rel (0) target = $region25
    $region24: #{tpu_custom_call.1} parent=1 // pred_region
      %s38 = ssub.s32 2048, 2048
      %39 = vsyncadd [#allocation6], %s38
      %s40 = sshll.u32 [#allocation5], 4
      %s41 = int_to_ptr.vmem [resolvable:$true] %s40
      %46 = dma.hbm_to_vmem [thread:$0]  %s5, 2048, %s41, [#allocation6], 64, 64, 4
    $region25: #{tpu_custom_call.1} parent=1 // pred_fallthru
      _
    // Predicated region
    $region26: #{tpu_custom_call.1} parent=1 // pred_check
      _
    $region27: #{tpu_custom_call.1} parent=1 // pred_check_branch
      %48 = sbr.rel (0) target = $region29
    $region28: #{tpu_custom_call.1} parent=1 // pred_region
      _
    $region29: #{tpu_custom_call.1} parent=1 // pred_fallthru
      _
    // Predicated region
    $region30: #{tpu_custom_call.1} parent=1 // pred_check
      _
    $region31: #{tpu_custom_call.1} parent=1 // pred_check_branch
      %50 = sbr.rel (0) target = $region33
    $region32: #{tpu_custom_call.1} parent=1 // pred_region
      %51 = dma.done [#allocation3], 8192
    $region33: #{tpu_custom_call.1} parent=1 // pred_fallthru
      _
    // Predicated region
    $region34: #{tpu_custom_call.1} parent=1 // pred_check
      _
    $region35: #{tpu_custom_call.1} parent=1 // pred_check_branch
      %53 = sbr.rel (0) target = $region37
    $region36: #{tpu_custom_call.1} parent=1 // pred_region
      %54 = dma.done [#allocation6], 2048
    $region37: #{tpu_custom_call.1} parent=1 // pred_fallthru
      _
    %v56 = vld [vmem:[%s0] sm:$0xff]
    %v57 = vld [vmem:[%s0 + $0x8] sm:$0xff]
    %v58 = vld [vmem:[%s0 + $0x10] sm:$0xff]
    %v59 = vld [vmem:[%s0 + $0x18] sm:$0xff]
    %v60 = vld [vmem:[%s0 + $0x20] sm:$0xff]
    %v61 = vld [vmem:[%s0 + $0x28] sm:$0xff]
    %v62 = vld [vmem:[%s0 + $0x30] sm:$0xff]
    %v63 = vld [vmem:[%s0 + $0x38] sm:$0xff]
    %v64 = vld [vmem:[%s0 + $0x40] sm:$0xff]
    %v65 = vld [vmem:[%s0 + $0x48] sm:$0xff]
    %v66 = vld [vmem:[%s0 + $0x50] sm:$0xff]
    %v67 = vld [vmem:[%s0 + $0x58] sm:$0xff]
    %v68 = vld [vmem:[%s0 + $0x60] sm:$0xff]
    %v69 = vld [vmem:[%s0 + $0x68] sm:$0xff]
    %v70 = vld [vmem:[%s0 + $0x70] sm:$0xff]
    %v71 = vld [vmem:[%s0 + $0x78] sm:$0xff]
    %v72 = vld [vmem:[%s0 + $0x80] sm:$0xff]
    %v73 = vld [vmem:[%s0 + $0x88] sm:$0xff]
    %v74 = vld [vmem:[%s0 + $0x90] sm:$0xff]
    %v75 = vld [vmem:[%s0 + $0x98] sm:$0xff]
    %v76 = vld [vmem:[%s0 + $0xa0] sm:$0xff]
    %v77 = vld [vmem:[%s0 + $0xa8] sm:$0xff]
    %v78 = vld [vmem:[%s0 + $0xb0] sm:$0xff]
    %v79 = vld [vmem:[%s0 + $0xb8] sm:$0xff]
    %v80 = vld [vmem:[%s0 + $0xc0] sm:$0xff]
    %v81 = vld [vmem:[%s0 + $0xc8] sm:$0xff]
    %v82 = vld [vmem:[%s0 + $0xd0] sm:$0xff]
    %v83 = vld [vmem:[%s0 + $0xd8] sm:$0xff]
    %v84 = vld [vmem:[%s0 + $0xe0] sm:$0xff]
    %v85 = vld [vmem:[%s0 + $0xe8] sm:$0xff]
    %v86 = vld [vmem:[%s0 + $0xf0] sm:$0xff]
    %v87 = vld [vmem:[%s0 + $0xf8] sm:$0xff]
    %v88 = vld [vmem:[%s0 + $0x100] sm:$0xff]
    %v89 = vld [vmem:[%s0 + $0x108] sm:$0xff]
    %v90 = vld [vmem:[%s0 + $0x110] sm:$0xff]
    %v91 = vld [vmem:[%s0 + $0x118] sm:$0xff]
    %v92 = vld [vmem:[%s0 + $0x120] sm:$0xff]
    %v93 = vld [vmem:[%s0 + $0x128] sm:$0xff]
    %v94 = vld [vmem:[%s0 + $0x130] sm:$0xff]
    %v95 = vld [vmem:[%s0 + $0x138] sm:$0xff]
    %v96 = vld [vmem:[%s0 + $0x140] sm:$0xff]
    %v97 = vld [vmem:[%s0 + $0x148] sm:$0xff]
    %v98 = vld [vmem:[%s0 + $0x150] sm:$0xff]
    %v99 = vld [vmem:[%s0 + $0x158] sm:$0xff]
    %v100 = vld [vmem:[%s0 + $0x160] sm:$0xff]
    %v101 = vld [vmem:[%s0 + $0x168] sm:$0xff]
    %v102 = vld [vmem:[%s0 + $0x170] sm:$0xff]
    %v103 = vld [vmem:[%s0 + $0x178] sm:$0xff]
    %v104 = vld [vmem:[%s0 + $0x180] sm:$0xff]
    %v105 = vld [vmem:[%s0 + $0x188] sm:$0xff]
    %v106 = vld [vmem:[%s0 + $0x190] sm:$0xff]
    %v107 = vld [vmem:[%s0 + $0x198] sm:$0xff]
    %v108 = vld [vmem:[%s0 + $0x1a0] sm:$0xff]
    %v109 = vld [vmem:[%s0 + $0x1a8] sm:$0xff]
    %v110 = vld [vmem:[%s0 + $0x1b0] sm:$0xff]
    %v111 = vld [vmem:[%s0 + $0x1b8] sm:$0xff]
    %v112 = vld [vmem:[%s0 + $0x1c0] sm:$0xff]
    %v113 = vld [vmem:[%s0 + $0x1c8] sm:$0xff]
    %v114 = vld [vmem:[%s0 + $0x1d0] sm:$0xff]
    %v115 = vld [vmem:[%s0 + $0x1d8] sm:$0xff]
    %v116 = vld [vmem:[%s0 + $0x1e0] sm:$0xff]
    %v117 = vld [vmem:[%s0 + $0x1e8] sm:$0xff]
    %v118 = vld [vmem:[%s0 + $0x1f0] sm:$0xff]
    %v119 = vld [vmem:[%s0 + $0x1f8] sm:$0xff]
    %v120 = vld [vmem:[%s0 + $0x200] sm:$0xff]
    %v121 = vld [vmem:[%s0 + $0x208] sm:$0xff]
    %v122 = vld [vmem:[%s0 + $0x210] sm:$0xff]
    %v123 = vld [vmem:[%s0 + $0x218] sm:$0xff]
    %v124 = vld [vmem:[%s0 + $0x220] sm:$0xff]
    %v125 = vld [vmem:[%s0 + $0x228] sm:$0xff]
    %v126 = vld [vmem:[%s0 + $0x230] sm:$0xff]
    %v127 = vld [vmem:[%s0 + $0x238] sm:$0xff]
    %v128 = vld [vmem:[%s0 + $0x240] sm:$0xff]
    %v129 = vld [vmem:[%s0 + $0x248] sm:$0xff]
    %v130 = vld [vmem:[%s0 + $0x250] sm:$0xff]
    %v131 = vld [vmem:[%s0 + $0x258] sm:$0xff]
    %v132 = vld [vmem:[%s0 + $0x260] sm:$0xff]
    %v133 = vld [vmem:[%s0 + $0x268] sm:$0xff]
    %v134 = vld [vmem:[%s0 + $0x270] sm:$0xff]
    %v135 = vld [vmem:[%s0 + $0x278] sm:$0xff]
    %v136 = vld [vmem:[%s0 + $0x280] sm:$0xff]
    %v137 = vld [vmem:[%s0 + $0x288] sm:$0xff]
    %v138 = vld [vmem:[%s0 + $0x290] sm:$0xff]
    %v139 = vld [vmem:[%s0 + $0x298] sm:$0xff]
    %v140 = vld [vmem:[%s0 + $0x2a0] sm:$0xff]
    %v141 = vld [vmem:[%s0 + $0x2a8] sm:$0xff]
    %v142 = vld [vmem:[%s0 + $0x2b0] sm:$0xff]
    %v143 = vld [vmem:[%s0 + $0x2b8] sm:$0xff]
    %v144 = vld [vmem:[%s0 + $0x2c0] sm:$0xff]
    %v145 = vld [vmem:[%s0 + $0x2c8] sm:$0xff]
    %v146 = vld [vmem:[%s0 + $0x2d0] sm:$0xff]
    %v147 = vld [vmem:[%s0 + $0x2d8] sm:$0xff]
    %v148 = vld [vmem:[%s0 + $0x2e0] sm:$0xff]
    %v149 = vld [vmem:[%s0 + $0x2e8] sm:$0xff]
    %v150 = vld [vmem:[%s0 + $0x2f0] sm:$0xff]
    %v151 = vld [vmem:[%s0 + $0x2f8] sm:$0xff]
    %v152 = vld [vmem:[%s0 + $0x300] sm:$0xff]
    %v153 = vld [vmem:[%s0 + $0x308] sm:$0xff]
    %v154 = vld [vmem:[%s0 + $0x310] sm:$0xff]
    %v155 = vld [vmem:[%s0 + $0x318] sm:$0xff]
    %v156 = vld [vmem:[%s0 + $0x320] sm:$0xff]
    %v157 = vld [vmem:[%s0 + $0x328] sm:$0xff]
    %v158 = vld [vmem:[%s0 + $0x330] sm:$0xff]
    %v159 = vld [vmem:[%s0 + $0x338] sm:$0xff]
    %v160 = vld [vmem:[%s0 + $0x340] sm:$0xff]
    %v161 = vld [vmem:[%s0 + $0x348] sm:$0xff]
    %v162 = vld [vmem:[%s0 + $0x350] sm:$0xff]
    %v163 = vld [vmem:[%s0 + $0x358] sm:$0xff]
    %v164 = vld [vmem:[%s0 + $0x360] sm:$0xff]
    %v165 = vld [vmem:[%s0 + $0x368] sm:$0xff]
    %v166 = vld [vmem:[%s0 + $0x370] sm:$0xff]
    %v167 = vld [vmem:[%s0 + $0x378] sm:$0xff]
    %v168 = vpack.c.bf16 %v63, %v56
    %v169 = vpack.c.bf16 %v64, %v57
    %v170 = vpack.c.bf16 %v65, %v58
    %v171 = vpack.c.bf16 %v66, %v59
    %v172 = vpack.c.bf16 %v67, %v60
    %v173 = vpack.c.bf16 %v68, %v61
    %v174 = vpack.c.bf16 %v69, %v62
    %v175 = vpack.c.bf16 %v77, %v70
    %v176 = vpack.c.bf16 %v78, %v71
    %v177 = vpack.c.bf16 %v79, %v72
    %v178 = vpack.c.bf16 %v80, %v73
    %v179 = vpack.c.bf16 %v81, %v74
    %v180 = vpack.c.bf16 %v82, %v75
    %v181 = vpack.c.bf16 %v83, %v76
    %v182 = vpack.c.bf16 %v91, %v84
    %v183 = vpack.c.bf16 %v92, %v85
    %v184 = vpack.c.bf16 %v93, %v86
    %v185 = vpack.c.bf16 %v94, %v87
    %v186 = vpack.c.bf16 %v95, %v88
    %v187 = vpack.c.bf16 %v96, %v89
    %v188 = vpack.c.bf16 %v97, %v90
    %v189 = vpack.c.bf16 %v105, %v98
    %v190 = vpack.c.bf16 %v106, %v99
    %v191 = vpack.c.bf16 %v107, %v100
    %v192 = vpack.c.bf16 %v108, %v101
    %v193 = vpack.c.bf16 %v109, %v102
    %v194 = vpack.c.bf16 %v110, %v103
    %v195 = vpack.c.bf16 %v111, %v104
    %v196 = vpack.c.bf16 %v119, %v112
    %v197 = vpack.c.bf16 %v120, %v113
    %v198 = vpack.c.bf16 %v121, %v114
    %v199 = vpack.c.bf16 %v122, %v115
    %v200 = vpack.c.bf16 %v123, %v116
    %v201 = vpack.c.bf16 %v124, %v117
    %v202 = vpack.c.bf16 %v125, %v118
    %v203 = vpack.c.bf16 %v133, %v126
    %v204 = vpack.c.bf16 %v134, %v127
    %v205 = vpack.c.bf16 %v135, %v128
    %v206 = vpack.c.bf16 %v136, %v129
    %v207 = vpack.c.bf16 %v137, %v130
    %v208 = vpack.c.bf16 %v138, %v131
    %v209 = vpack.c.bf16 %v139, %v132
    %v210 = vpack.c.bf16 %v147, %v140
    %v211 = vpack.c.bf16 %v148, %v141
    %v212 = vpack.c.bf16 %v149, %v142
    %v213 = vpack.c.bf16 %v150, %v143
    %v214 = vpack.c.bf16 %v151, %v144
    %v215 = vpack.c.bf16 %v152, %v145
    %v216 = vpack.c.bf16 %v153, %v146
    %v217 = vpack.c.bf16 %v161, %v154
    %v218 = vpack.c.bf16 %v162, %v155
    %v219 = vpack.c.bf16 %v163, %v156
    %v220 = vpack.c.bf16 %v164, %v157
    %v221 = vpack.c.bf16 %v165, %v158
    %v222 = vpack.c.bf16 %v166, %v159
    %v223 = vpack.c.bf16 %v167, %v160
    %v224 = vld [vmem:[%s1] sm:$0xff]
    %v225 = vld [vmem:[%s1 + $0x8] sm:$0xff]
    %v226 = vld [vmem:[%s1 + $0x10] sm:$0xff]
    %v227 = vld [vmem:[%s1 + $0x18] sm:$0xff]
    %v228 = vld [vmem:[%s1 + $0x20] sm:$0xff]
    %v229 = vld [vmem:[%s1 + $0x28] sm:$0xff]
    %v230 = vld [vmem:[%s1 + $0x30] sm:$0xff]
    %v231 = vld [vmem:[%s1 + $0x38] sm:$0xff]
    %v232 = vld [vmem:[%s1 + $0x40] sm:$0xff]
    %v233 = vld [vmem:[%s1 + $0x48] sm:$0xff]
    %v234 = vld [vmem:[%s1 + $0x50] sm:$0xff]
    %v235 = vld [vmem:[%s1 + $0x58] sm:$0xff]
    %v236 = vld [vmem:[%s1 + $0x60] sm:$0xff]
    %v237 = vld [vmem:[%s1 + $0x68] sm:$0xff]
    %v238 = vld [vmem:[%s1 + $0x70] sm:$0xff]
    %v239 = vld [vmem:[%s1 + $0x78] sm:$0xff]
    %v240 = vld [vmem:[%s1 + $0x80] sm:$0xff]
    %v241 = vld [vmem:[%s1 + $0x88] sm:$0xff]
    %v242 = vld [vmem:[%s1 + $0x90] sm:$0xff]
    %v243 = vld [vmem:[%s1 + $0x98] sm:$0xff]
    %v244 = vld [vmem:[%s1 + $0xa0] sm:$0xff]
    %v245 = vld [vmem:[%s1 + $0xa8] sm:$0xff]
    %v246 = vld [vmem:[%s1 + $0xb0] sm:$0xff]
    %v247 = vld [vmem:[%s1 + $0xb8] sm:$0xff]
    %v248 = vld [vmem:[%s1 + $0xc0] sm:$0xff]
    %v249 = vld [vmem:[%s1 + $0xc8] sm:$0xff]
    %v250 = vld [vmem:[%s1 + $0xd0] sm:$0xff]
    %v251 = vld [vmem:[%s1 + $0xd8] sm:$0xff]
    %v252 = vld [vmem:[%s1 + $0xe0] sm:$0xff]
    %v253 = vld [vmem:[%s1 + $0xe8] sm:$0xff]
    %v254 = vld [vmem:[%s1 + $0xf0] sm:$0xff]
    %v255 = vld [vmem:[%s1 + $0xf8] sm:$0xff]
    %v256 = vld [vmem:[%s1 + $0x100] sm:$0xff]
    %v257 = vld [vmem:[%s1 + $0x108] sm:$0xff]
    %v258 = vld [vmem:[%s1 + $0x110] sm:$0xff]
    %v259 = vld [vmem:[%s1 + $0x118] sm:$0xff]
    %v260 = vld [vmem:[%s1 + $0x120] sm:$0xff]
    %v261 = vld [vmem:[%s1 + $0x128] sm:$0xff]
    %v262 = vld [vmem:[%s1 + $0x130] sm:$0xff]
    %v263 = vld [vmem:[%s1 + $0x138] sm:$0xff]
    %v264 = vld [vmem:[%s1 + $0x140] sm:$0xff]
    %v265 = vld [vmem:[%s1 + $0x148] sm:$0xff]
    %v266 = vld [vmem:[%s1 + $0x150] sm:$0xff]
    %v267 = vld [vmem:[%s1 + $0x158] sm:$0xff]
    %v268 = vld [vmem:[%s1 + $0x160] sm:$0xff]
    %v269 = vld [vmem:[%s1 + $0x168] sm:$0xff]
    %v270 = vld [vmem:[%s1 + $0x170] sm:$0xff]
    %v271 = vld [vmem:[%s1 + $0x178] sm:$0xff]
    %v272 = vld [vmem:[%s1 + $0x180] sm:$0xff]
    %v273 = vld [vmem:[%s1 + $0x188] sm:$0xff]
    %v274 = vld [vmem:[%s1 + $0x190] sm:$0xff]
    %v275 = vld [vmem:[%s1 + $0x198] sm:$0xff]
    %v276 = vld [vmem:[%s1 + $0x1a0] sm:$0xff]
    %v277 = vld [vmem:[%s1 + $0x1a8] sm:$0xff]
    %v278 = vld [vmem:[%s1 + $0x1b0] sm:$0xff]
    %v279 = vld [vmem:[%s1 + $0x1b8] sm:$0xff]
    %v280 = vld [vmem:[%s1 + $0x1c0] sm:$0xff]
    %v281 = vld [vmem:[%s1 + $0x1c8] sm:$0xff]
    %v282 = vld [vmem:[%s1 + $0x1d0] sm:$0xff]
    %v283 = vld [vmem:[%s1 + $0x1d8] sm:$0xff]
    %v284 = vld [vmem:[%s1 + $0x1e0] sm:$0xff]
    %v285 = vld [vmem:[%s1 + $0x1e8] sm:$0xff]
    %v286 = vld [vmem:[%s1 + $0x1f0] sm:$0xff]
    %v287 = vld [vmem:[%s1 + $0x1f8] sm:$0xff]
    %v288 = vld [vmem:[%s1 + $0x200] sm:$0xff]
    %v289 = vld [vmem:[%s1 + $0x208] sm:$0xff]
    %v290 = vld [vmem:[%s1 + $0x210] sm:$0xff]
    %v291 = vld [vmem:[%s1 + $0x218] sm:$0xff]
    %v292 = vld [vmem:[%s1 + $0x220] sm:$0xff]
    %v293 = vld [vmem:[%s1 + $0x228] sm:$0xff]
    %v294 = vld [vmem:[%s1 + $0x230] sm:$0xff]
    %v295 = vld [vmem:[%s1 + $0x238] sm:$0xff]
    %v296 = vld [vmem:[%s1 + $0x240] sm:$0xff]
    %v297 = vld [vmem:[%s1 + $0x248] sm:$0xff]
    %v298 = vld [vmem:[%s1 + $0x250] sm:$0xff]
    %v299 = vld [vmem:[%s1 + $0x258] sm:$0xff]
    %v300 = vld [vmem:[%s1 + $0x260] sm:$0xff]
    %v301 = vld [vmem:[%s1 + $0x268] sm:$0xff]
    %v302 = vld [vmem:[%s1 + $0x270] sm:$0xff]
    %v303 = vld [vmem:[%s1 + $0x278] sm:$0xff]
    %v304 = vld [vmem:[%s1 + $0x280] sm:$0xff]
    %v305 = vld [vmem:[%s1 + $0x288] sm:$0xff]
    %v306 = vld [vmem:[%s1 + $0x290] sm:$0xff]
    %v307 = vld [vmem:[%s1 + $0x298] sm:$0xff]
    %v308 = vld [vmem:[%s1 + $0x2a0] sm:$0xff]
    %v309 = vld [vmem:[%s1 + $0x2a8] sm:$0xff]
    %v310 = vld [vmem:[%s1 + $0x2b0] sm:$0xff]
    %v311 = vld [vmem:[%s1 + $0x2b8] sm:$0xff]
    %v312 = vld [vmem:[%s1 + $0x2c0] sm:$0xff]
    %v313 = vld [vmem:[%s1 + $0x2c8] sm:$0xff]
    %v314 = vld [vmem:[%s1 + $0x2d0] sm:$0xff]
    %v315 = vld [vmem:[%s1 + $0x2d8] sm:$0xff]
    %v316 = vld [vmem:[%s1 + $0x2e0] sm:$0xff]
    %v317 = vld [vmem:[%s1 + $0x2e8] sm:$0xff]
    %v318 = vld [vmem:[%s1 + $0x2f0] sm:$0xff]
    %v319 = vld [vmem:[%s1 + $0x2f8] sm:$0xff]
    %v320 = vld [vmem:[%s1 + $0x300] sm:$0xff]
    %v321 = vld [vmem:[%s1 + $0x308] sm:$0xff]
    %v322 = vld [vmem:[%s1 + $0x310] sm:$0xff]
    %v323 = vld [vmem:[%s1 + $0x318] sm:$0xff]
    %v324 = vld [vmem:[%s1 + $0x320] sm:$0xff]
    %v325 = vld [vmem:[%s1 + $0x328] sm:$0xff]
    %v326 = vld [vmem:[%s1 + $0x330] sm:$0xff]
    %v327 = vld [vmem:[%s1 + $0x338] sm:$0xff]
    %v328 = vld [vmem:[%s1 + $0x340] sm:$0xff]
    %v329 = vld [vmem:[%s1 + $0x348] sm:$0xff]
    %v330 = vld [vmem:[%s1 + $0x350] sm:$0xff]
    %v331 = vld [vmem:[%s1 + $0x358] sm:$0xff]
    %v332 = vld [vmem:[%s1 + $0x360] sm:$0xff]
    %v333 = vld [vmem:[%s1 + $0x368] sm:$0xff]
    %v334 = vld [vmem:[%s1 + $0x370] sm:$0xff]
    %v335 = vld [vmem:[%s1 + $0x378] sm:$0xff]
    %v336 = vld [vmem:[%s1 + $0x380] sm:$0xff]
    %v337 = vld [vmem:[%s1 + $0x388] sm:$0xff]
    %v338 = vld [vmem:[%s1 + $0x390] sm:$0xff]
    %v339 = vld [vmem:[%s1 + $0x398] sm:$0xff]
    %v340 = vld [vmem:[%s1 + $0x3a0] sm:$0xff]
    %v341 = vld [vmem:[%s1 + $0x3a8] sm:$0xff]
    %v342 = vld [vmem:[%s1 + $0x3b0] sm:$0xff]
    %v343 = vld [vmem:[%s1 + $0x3b8] sm:$0xff]
    %v344 = vld [vmem:[%s1 + $0x3c0] sm:$0xff]
    %v345 = vld [vmem:[%s1 + $0x3c8] sm:$0xff]
    %v346 = vld [vmem:[%s1 + $0x3d0] sm:$0xff]
    %v347 = vld [vmem:[%s1 + $0x3d8] sm:$0xff]
    %v348 = vld [vmem:[%s1 + $0x3e0] sm:$0xff]
    %v349 = vld [vmem:[%s1 + $0x3e8] sm:$0xff]
    %v350 = vld [vmem:[%s1 + $0x3f0] sm:$0xff]
    %v351 = vld [vmem:[%s1 + $0x3f8] sm:$0xff]
    %v352 = vld [vmem:[%s1 + $0x400] sm:$0xff]
    %v353 = vld [vmem:[%s1 + $0x408] sm:$0xff]
    %v354 = vld [vmem:[%s1 + $0x410] sm:$0xff]
    %v355 = vld [vmem:[%s1 + $0x418] sm:$0xff]
    %v356 = vld [vmem:[%s1 + $0x420] sm:$0xff]
    %v357 = vld [vmem:[%s1 + $0x428] sm:$0xff]
    %v358 = vld [vmem:[%s1 + $0x430] sm:$0xff]
    %v359 = vld [vmem:[%s1 + $0x438] sm:$0xff]
    %v360 = vld [vmem:[%s1 + $0x440] sm:$0xff]
    %v361 = vld [vmem:[%s1 + $0x448] sm:$0xff]
    %v362 = vld [vmem:[%s1 + $0x450] sm:$0xff]
    %v363 = vld [vmem:[%s1 + $0x458] sm:$0xff]
    %v364 = vld [vmem:[%s1 + $0x460] sm:$0xff]
    %v365 = vld [vmem:[%s1 + $0x468] sm:$0xff]
    %v366 = vld [vmem:[%s1 + $0x470] sm:$0xff]
    %v367 = vld [vmem:[%s1 + $0x478] sm:$0xff]
    %v368 = vld [vmem:[%s1 + $0x480] sm:$0xff]
    %v369 = vld [vmem:[%s1 + $0x488] sm:$0xff]
    %v370 = vld [vmem:[%s1 + $0x490] sm:$0xff]
    %v371 = vld [vmem:[%s1 + $0x498] sm:$0xff]
    %v372 = vld [vmem:[%s1 + $0x4a0] sm:$0xff]
    %v373 = vld [vmem:[%s1 + $0x4a8] sm:$0xff]
    %v374 = vld [vmem:[%s1 + $0x4b0] sm:$0xff]
    %v375 = vld [vmem:[%s1 + $0x4b8] sm:$0xff]
    %v376 = vld [vmem:[%s1 + $0x4c0] sm:$0xff]
    %v377 = vld [vmem:[%s1 + $0x4c8] sm:$0xff]
    %v378 = vld [vmem:[%s1 + $0x4d0] sm:$0xff]
    %v379 = vld [vmem:[%s1 + $0x4d8] sm:$0xff]
    %v380 = vld [vmem:[%s1 + $0x4e0] sm:$0xff]
    %v381 = vld [vmem:[%s1 + $0x4e8] sm:$0xff]
    %v382 = vld [vmem:[%s1 + $0x4f0] sm:$0xff]
    %v383 = vld [vmem:[%s1 + $0x4f8] sm:$0xff]
    %v384 = vld [vmem:[%s1 + $0x500] sm:$0xff]
    %v385 = vld [vmem:[%s1 + $0x508] sm:$0xff]
    %v386 = vld [vmem:[%s1 + $0x510] sm:$0xff]
    %v387 = vld [vmem:[%s1 + $0x518] sm:$0xff]
    %v388 = vld [vmem:[%s1 + $0x520] sm:$0xff]
    %v389 = vld [vmem:[%s1 + $0x528] sm:$0xff]
    %v390 = vld [vmem:[%s1 + $0x530] sm:$0xff]
    %v391 = vld [vmem:[%s1 + $0x538] sm:$0xff]
    %v392 = vld [vmem:[%s1 + $0x540] sm:$0xff]
    %v393 = vld [vmem:[%s1 + $0x548] sm:$0xff]
    %v394 = vld [vmem:[%s1 + $0x550] sm:$0xff]
    %v395 = vld [vmem:[%s1 + $0x558] sm:$0xff]
    %v396 = vld [vmem:[%s1 + $0x560] sm:$0xff]
    %v397 = vld [vmem:[%s1 + $0x568] sm:$0xff]
    %v398 = vld [vmem:[%s1 + $0x570] sm:$0xff]
    %v399 = vld [vmem:[%s1 + $0x578] sm:$0xff]
    %v400 = vld [vmem:[%s1 + $0x580] sm:$0xff]
    %v401 = vld [vmem:[%s1 + $0x588] sm:$0xff]
    %v402 = vld [vmem:[%s1 + $0x590] sm:$0xff]
    %v403 = vld [vmem:[%s1 + $0x598] sm:$0xff]
    %v404 = vld [vmem:[%s1 + $0x5a0] sm:$0xff]
    %v405 = vld [vmem:[%s1 + $0x5a8] sm:$0xff]
    %v406 = vld [vmem:[%s1 + $0x5b0] sm:$0xff]
    %v407 = vld [vmem:[%s1 + $0x5b8] sm:$0xff]
    %v408 = vld [vmem:[%s1 + $0x5c0] sm:$0xff]
    %v409 = vld [vmem:[%s1 + $0x5c8] sm:$0xff]
    %v410 = vld [vmem:[%s1 + $0x5d0] sm:$0xff]
    %v411 = vld [vmem:[%s1 + $0x5d8] sm:$0xff]
    %v412 = vld [vmem:[%s1 + $0x5e0] sm:$0xff]
    %v413 = vld [vmem:[%s1 + $0x5e8] sm:$0xff]
    %v414 = vld [vmem:[%s1 + $0x5f0] sm:$0xff]
    %v415 = vld [vmem:[%s1 + $0x5f8] sm:$0xff]
    %v416 = vld [vmem:[%s1 + $0x600] sm:$0xff]
    %v417 = vld [vmem:[%s1 + $0x608] sm:$0xff]
    %v418 = vld [vmem:[%s1 + $0x610] sm:$0xff]
    %v419 = vld [vmem:[%s1 + $0x618] sm:$0xff]
    %v420 = vld [vmem:[%s2] sm:$0xf]
    %v422 = vlaneseq
    %v423 = vshrl.u32 %v422, 7
    %v424 = vsub.s32 0, %v423
    %v425 = vrot.slane %v420, %v424
    %v426 = vlaneseq
    %v427 = vshrl.u32 %v426, 7
    %v428 = vsub.s32 1, %v427
    %v429 = vrot.slane %v420, %v428
    %v430 = vlaneseq
    %v431 = vshrl.u32 %v430, 7
    %v432 = vsub.s32 2, %v431
    %v433 = vrot.slane %v420, %v432
    %v434 = vlaneseq
    %v435 = vshrl.u32 %v434, 7
    %v436 = vsub.s32 3, %v435
    %v437 = vrot.slane %v420, %v436
    %v638 = vunpack.c.l.b16 %v224
    %v639 = vunpack.c.h.b16 %v224
    %v640 = vunpack.c.l.b16 %v225
    %v641 = vunpack.c.h.b16 %v225
    %v642 = vunpack.c.l.b16 %v226
    %v643 = vunpack.c.h.b16 %v226
    %v644 = vunpack.c.l.b16 %v227
    %v645 = vunpack.c.h.b16 %v227
    %v646 = vunpack.c.l.b16 %v228
    %v647 = vunpack.c.h.b16 %v228
    %v648 = vunpack.c.l.b16 %v229
    %v649 = vunpack.c.h.b16 %v229
    %v650 = vunpack.c.l.b16 %v230
    %v651 = vunpack.c.h.b16 %v230
    %v652 = vunpack.c.l.b16 %v231
    %v653 = vunpack.c.h.b16 %v231
    %v654 = vunpack.c.l.b16 %v232
    %v655 = vunpack.c.h.b16 %v232
    %v656 = vunpack.c.l.b16 %v233
    %v657 = vunpack.c.h.b16 %v233
    %v658 = vunpack.c.l.b16 %v234
    %v659 = vunpack.c.h.b16 %v234
    %v660 = vunpack.c.l.b16 %v235
    %v661 = vunpack.c.h.b16 %v235
    %v662 = vunpack.c.l.b16 %v236
    %v663 = vunpack.c.h.b16 %v236
    %v664 = vunpack.c.l.b16 %v237
    %v665 = vunpack.c.h.b16 %v237
    %v666 = vunpack.c.l.b16 %v238
    %v667 = vunpack.c.h.b16 %v238
    %v668 = vunpack.c.l.b16 %v239
    %v669 = vunpack.c.h.b16 %v239
    %v670 = vunpack.c.l.b16 %v240
    %v671 = vunpack.c.h.b16 %v240
    %v672 = vunpack.c.l.b16 %v241
    %v673 = vunpack.c.h.b16 %v241
    %v674 = vunpack.c.l.b16 %v242
    %v675 = vunpack.c.h.b16 %v242
    %v676 = vunpack.c.l.b16 %v243
    %v677 = vunpack.c.h.b16 %v243
    %v678 = vunpack.c.l.b16 %v244
    %v679 = vunpack.c.h.b16 %v244
    %v680 = vunpack.c.l.b16 %v245
    %v681 = vunpack.c.h.b16 %v245
    %v682 = vunpack.c.l.b16 %v246
    %v683 = vunpack.c.h.b16 %v246
    %v684 = vunpack.c.l.b16 %v247
    %v685 = vunpack.c.h.b16 %v247
    %v686 = vunpack.c.l.b16 %v248
    %v687 = vunpack.c.h.b16 %v248
    %v688 = vunpack.c.l.b16 %v249
    %v689 = vunpack.c.h.b16 %v249
    %v690 = vunpack.c.l.b16 %v250
    %v691 = vunpack.c.h.b16 %v250
    %v692 = vunpack.c.l.b16 %v251
    %v693 = vunpack.c.h.b16 %v251
    %v694 = vunpack.c.l.b16 %v252
    %v695 = vunpack.c.h.b16 %v252
    %v696 = vunpack.c.l.b16 %v253
    %v697 = vunpack.c.h.b16 %v253
    %v698 = vunpack.c.l.b16 %v254
    %v699 = vunpack.c.h.b16 %v254
    %v700 = vunpack.c.l.b16 %v255
    %v701 = vunpack.c.h.b16 %v255
    %v702 = vunpack.c.l.b16 %v256
    %v703 = vunpack.c.h.b16 %v256
    %v704 = vunpack.c.l.b16 %v257
    %v705 = vunpack.c.h.b16 %v257
    %v706 = vunpack.c.l.b16 %v258
    %v707 = vunpack.c.h.b16 %v258
    %v708 = vunpack.c.l.b16 %v259
    %v709 = vunpack.c.h.b16 %v259
    %v710 = vunpack.c.l.b16 %v260
    %v711 = vunpack.c.h.b16 %v260
    %v712 = vunpack.c.l.b16 %v261
    %v713 = vunpack.c.h.b16 %v261
    %v714 = vunpack.c.l.b16 %v262
    %v715 = vunpack.c.h.b16 %v262
    %v716 = vunpack.c.l.b16 %v263
    %v717 = vunpack.c.h.b16 %v263
    %v718 = vunpack.c.l.b16 %v264
    %v719 = vunpack.c.h.b16 %v264
    %v720 = vunpack.c.l.b16 %v265
    %v721 = vunpack.c.h.b16 %v265
    %v722 = vunpack.c.l.b16 %v266
    %v723 = vunpack.c.h.b16 %v266
    %v724 = vunpack.c.l.b16 %v267
    %v725 = vunpack.c.h.b16 %v267
    %v726 = vunpack.c.l.b16 %v268
    %v727 = vunpack.c.h.b16 %v268
    %v728 = vunpack.c.l.b16 %v269
    %v729 = vunpack.c.h.b16 %v269
    %v730 = vunpack.c.l.b16 %v270
    %v731 = vunpack.c.h.b16 %v270
    %v732 = vunpack.c.l.b16 %v271
    %v733 = vunpack.c.h.b16 %v271
    %v734 = vunpack.c.l.b16 %v272
    %v735 = vunpack.c.h.b16 %v272
    %v736 = vunpack.c.l.b16 %v273
    %v737 = vunpack.c.h.b16 %v273
    %v738 = vunpack.c.l.b16 %v274
    %v739 = vunpack.c.h.b16 %v274
    %v740 = vunpack.c.l.b16 %v275
    %v741 = vunpack.c.h.b16 %v275
    %v742 = vunpack.c.l.b16 %v276
    %v743 = vunpack.c.h.b16 %v276
    %v744 = vunpack.c.l.b16 %v277
    %v745 = vunpack.c.h.b16 %v277
    %v746 = vunpack.c.l.b16 %v278
    %v747 = vunpack.c.h.b16 %v278
    %v748 = vunpack.c.l.b16 %v279
    %v749 = vunpack.c.h.b16 %v279
    %v750 = vunpack.c.l.b16 %v280
    %v751 = vunpack.c.h.b16 %v280
    %v752 = vunpack.c.l.b16 %v281
    %v753 = vunpack.c.h.b16 %v281
    %v754 = vunpack.c.l.b16 %v282
    %v755 = vunpack.c.h.b16 %v282
    %v756 = vunpack.c.l.b16 %v283
    %v757 = vunpack.c.h.b16 %v283
    %v758 = vunpack.c.l.b16 %v284
    %v759 = vunpack.c.h.b16 %v284
    %v760 = vunpack.c.l.b16 %v285
    %v761 = vunpack.c.h.b16 %v285
    %v762 = vunpack.c.l.b16 %v286
    %v763 = vunpack.c.h.b16 %v286
    %v764 = vunpack.c.l.b16 %v287
    %v765 = vunpack.c.h.b16 %v287
    %v766 = vunpack.c.l.b16 %v288
    %v767 = vunpack.c.h.b16 %v288
    %v768 = vunpack.c.l.b16 %v289
    %v769 = vunpack.c.h.b16 %v289
    %v770 = vunpack.c.l.b16 %v290
    %v771 = vunpack.c.h.b16 %v290
    %v772 = vunpack.c.l.b16 %v291
    %v773 = vunpack.c.h.b16 %v291
    %v774 = vunpack.c.l.b16 %v292
    %v775 = vunpack.c.h.b16 %v292
    %v776 = vunpack.c.l.b16 %v293
    %v777 = vunpack.c.h.b16 %v293
    %v778 = vunpack.c.l.b16 %v294
    %v779 = vunpack.c.h.b16 %v294
    %v780 = vunpack.c.l.b16 %v295
    %v781 = vunpack.c.h.b16 %v295
    %v782 = vunpack.c.l.b16 %v296
    %v783 = vunpack.c.h.b16 %v296
    %v784 = vunpack.c.l.b16 %v297
    %v785 = vunpack.c.h.b16 %v297
    %v786 = vunpack.c.l.b16 %v298
    %v787 = vunpack.c.h.b16 %v298
    %v788 = vunpack.c.l.b16 %v299
    %v789 = vunpack.c.h.b16 %v299
    %v790 = vunpack.c.l.b16 %v300
    %v791 = vunpack.c.h.b16 %v300
    %v792 = vunpack.c.l.b16 %v301
    %v793 = vunpack.c.h.b16 %v301
    %v794 = vunpack.c.l.b16 %v302
    %v795 = vunpack.c.h.b16 %v302
    %v796 = vunpack.c.l.b16 %v303
    %v797 = vunpack.c.h.b16 %v303
    %v798 = vunpack.c.l.b16 %v304
    %v799 = vunpack.c.h.b16 %v304
    %v800 = vunpack.c.l.b16 %v305
    %v801 = vunpack.c.h.b16 %v305
    %v802 = vunpack.c.l.b16 %v306
    %v803 = vunpack.c.h.b16 %v306
    %v804 = vunpack.c.l.b16 %v307
    %v805 = vunpack.c.h.b16 %v307
    %v806 = vunpack.c.l.b16 %v308
    %v807 = vunpack.c.h.b16 %v308
    %v808 = vunpack.c.l.b16 %v309
    %v809 = vunpack.c.h.b16 %v309
    %v810 = vunpack.c.l.b16 %v310
    %v811 = vunpack.c.h.b16 %v310
    %v812 = vunpack.c.l.b16 %v311
    %v813 = vunpack.c.h.b16 %v311
    %v814 = vunpack.c.l.b16 %v312
    %v815 = vunpack.c.h.b16 %v312
    %v816 = vunpack.c.l.b16 %v313
    %v817 = vunpack.c.h.b16 %v313
    %v818 = vunpack.c.l.b16 %v314
    %v819 = vunpack.c.h.b16 %v314
    %v820 = vunpack.c.l.b16 %v315
    %v821 = vunpack.c.h.b16 %v315
    %v822 = vunpack.c.l.b16 %v316
    %v823 = vunpack.c.h.b16 %v316
    %v824 = vunpack.c.l.b16 %v317
    %v825 = vunpack.c.h.b16 %v317
    %v826 = vunpack.c.l.b16 %v318
    %v827 = vunpack.c.h.b16 %v318
    %v828 = vunpack.c.l.b16 %v319
    %v829 = vunpack.c.h.b16 %v319
    %v830 = vunpack.c.l.b16 %v320
    %v831 = vunpack.c.h.b16 %v320
    %v832 = vunpack.c.l.b16 %v321
    %v833 = vunpack.c.h.b16 %v321
    %v834 = vunpack.c.l.b16 %v322
    %v835 = vunpack.c.h.b16 %v322
    %v836 = vunpack.c.l.b16 %v323
    %v837 = vunpack.c.h.b16 %v323
    %v838 = vunpack.c.l.b16 %v324
    %v839 = vunpack.c.h.b16 %v324
    %v840 = vunpack.c.l.b16 %v325
    %v841 = vunpack.c.h.b16 %v325
    %v842 = vunpack.c.l.b16 %v326
    %v843 = vunpack.c.h.b16 %v326
    %v844 = vunpack.c.l.b16 %v327
    %v845 = vunpack.c.h.b16 %v327
    %v846 = vunpack.c.l.b16 %v328
    %v847 = vunpack.c.h.b16 %v328
    %v848 = vunpack.c.l.b16 %v329
    %v849 = vunpack.c.h.b16 %v329
    %v850 = vunpack.c.l.b16 %v330
    %v851 = vunpack.c.h.b16 %v330
    %v852 = vunpack.c.l.b16 %v331
    %v853 = vunpack.c.h.b16 %v331
    %v854 = vunpack.c.l.b16 %v332
    %v855 = vunpack.c.h.b16 %v332
    %v856 = vunpack.c.l.b16 %v333
    %v857 = vunpack.c.h.b16 %v333
    %v858 = vunpack.c.l.b16 %v334
    %v859 = vunpack.c.h.b16 %v334
    %v860 = vunpack.c.l.b16 %v335
    %v861 = vunpack.c.h.b16 %v335
    %v862 = vunpack.c.l.b16 %v336
    %v863 = vunpack.c.h.b16 %v336
    %v864 = vunpack.c.l.b16 %v337
    %v865 = vunpack.c.h.b16 %v337
    %v866 = vunpack.c.l.b16 %v338
    %v867 = vunpack.c.h.b16 %v338
    %v868 = vunpack.c.l.b16 %v339
    %v869 = vunpack.c.h.b16 %v339
    %v870 = vunpack.c.l.b16 %v340
    %v871 = vunpack.c.h.b16 %v340
    %v872 = vunpack.c.l.b16 %v341
    %v873 = vunpack.c.h.b16 %v341
    %v874 = vunpack.c.l.b16 %v342
    %v875 = vunpack.c.h.b16 %v342
    %v876 = vunpack.c.l.b16 %v343
    %v877 = vunpack.c.h.b16 %v343
    %v878 = vunpack.c.l.b16 %v344
    %v879 = vunpack.c.h.b16 %v344
    %v880 = vunpack.c.l.b16 %v345
    %v881 = vunpack.c.h.b16 %v345
    %v882 = vunpack.c.l.b16 %v346
    %v883 = vunpack.c.h.b16 %v346
    %v884 = vunpack.c.l.b16 %v347
    %v885 = vunpack.c.h.b16 %v347
    %v886 = vunpack.c.l.b16 %v348
    %v887 = vunpack.c.h.b16 %v348
    %v888 = vunpack.c.l.b16 %v349
    %v889 = vunpack.c.h.b16 %v349
    %v890 = vunpack.c.l.b16 %v350
    %v891 = vunpack.c.h.b16 %v350
    %v892 = vunpack.c.l.b16 %v351
    %v893 = vunpack.c.h.b16 %v351
    %v894 = vunpack.c.l.b16 %v352
    %v895 = vunpack.c.h.b16 %v352
    %v896 = vunpack.c.l.b16 %v353
    %v897 = vunpack.c.h.b16 %v353
    %v898 = vunpack.c.l.b16 %v354
    %v899 = vunpack.c.h.b16 %v354
    %v900 = vunpack.c.l.b16 %v355
    %v901 = vunpack.c.h.b16 %v355
    %v902 = vunpack.c.l.b16 %v356
    %v903 = vunpack.c.h.b16 %v356
    %v904 = vunpack.c.l.b16 %v357
    %v905 = vunpack.c.h.b16 %v357
    %v906 = vunpack.c.l.b16 %v358
    %v907 = vunpack.c.h.b16 %v358
    %v908 = vunpack.c.l.b16 %v359
    %v909 = vunpack.c.h.b16 %v359
    %v910 = vunpack.c.l.b16 %v360
    %v911 = vunpack.c.h.b16 %v360
    %v912 = vunpack.c.l.b16 %v361
    %v913 = vunpack.c.h.b16 %v361
    %v914 = vunpack.c.l.b16 %v362
    %v915 = vunpack.c.h.b16 %v362
    %v916 = vunpack.c.l.b16 %v363
    %v917 = vunpack.c.h.b16 %v363
    %v918 = vunpack.c.l.b16 %v364
    %v919 = vunpack.c.h.b16 %v364
    %v920 = vunpack.c.l.b16 %v365
    %v921 = vunpack.c.h.b16 %v365
    %v922 = vunpack.c.l.b16 %v366
    %v923 = vunpack.c.h.b16 %v366
    %v924 = vunpack.c.l.b16 %v367
    %v925 = vunpack.c.h.b16 %v367
    %v926 = vunpack.c.l.b16 %v368
    %v927 = vunpack.c.h.b16 %v368
    %v928 = vunpack.c.l.b16 %v369
    %v929 = vunpack.c.h.b16 %v369
    %v930 = vunpack.c.l.b16 %v370
    %v931 = vunpack.c.h.b16 %v370
    %v932 = vunpack.c.l.b16 %v371
    %v933 = vunpack.c.h.b16 %v371
    %v934 = vunpack.c.l.b16 %v372
    %v935 = vunpack.c.h.b16 %v372
    %v936 = vunpack.c.l.b16 %v373
    %v937 = vunpack.c.h.b16 %v373
    %v938 = vunpack.c.l.b16 %v374
    %v939 = vunpack.c.h.b16 %v374
    %v940 = vunpack.c.l.b16 %v375
    %v941 = vunpack.c.h.b16 %v375
    %v942 = vunpack.c.l.b16 %v376
    %v943 = vunpack.c.h.b16 %v376
    %v944 = vunpack.c.l.b16 %v377
    %v945 = vunpack.c.h.b16 %v377
    %v946 = vunpack.c.l.b16 %v378
    %v947 = vunpack.c.h.b16 %v378
    %v948 = vunpack.c.l.b16 %v379
    %v949 = vunpack.c.h.b16 %v379
    %v950 = vunpack.c.l.b16 %v380
    %v951 = vunpack.c.h.b16 %v380
    %v952 = vunpack.c.l.b16 %v381
    %v953 = vunpack.c.h.b16 %v381
    %v954 = vunpack.c.l.b16 %v382
    %v955 = vunpack.c.h.b16 %v382
    %v956 = vunpack.c.l.b16 %v383
    %v957 = vunpack.c.h.b16 %v383
    %v958 = vunpack.c.l.b16 %v384
    %v959 = vunpack.c.h.b16 %v384
    %v960 = vunpack.c.l.b16 %v385
    %v961 = vunpack.c.h.b16 %v385
    %v962 = vunpack.c.l.b16 %v386
    %v963 = vunpack.c.h.b16 %v386
    %v964 = vunpack.c.l.b16 %v387
    %v965 = vunpack.c.h.b16 %v387
    %v966 = vunpack.c.l.b16 %v388
    %v967 = vunpack.c.h.b16 %v388
    %v968 = vunpack.c.l.b16 %v389
    %v969 = vunpack.c.h.b16 %v389
    %v970 = vunpack.c.l.b16 %v390
    %v971 = vunpack.c.h.b16 %v390
    %v972 = vunpack.c.l.b16 %v391
    %v973 = vunpack.c.h.b16 %v391
    %v974 = vunpack.c.l.b16 %v392
    %v975 = vunpack.c.h.b16 %v392
    %v976 = vunpack.c.l.b16 %v393
    %v977 = vunpack.c.h.b16 %v393
    %v978 = vunpack.c.l.b16 %v394
    %v979 = vunpack.c.h.b16 %v394
    %v980 = vunpack.c.l.b16 %v395
    %v981 = vunpack.c.h.b16 %v395
    %v982 = vunpack.c.l.b16 %v396
    %v983 = vunpack.c.h.b16 %v396
    %v984 = vunpack.c.l.b16 %v397
    %v985 = vunpack.c.h.b16 %v397
    %v986 = vunpack.c.l.b16 %v398
    %v987 = vunpack.c.h.b16 %v398
    %v988 = vunpack.c.l.b16 %v399
    %v989 = vunpack.c.h.b16 %v399
    %v990 = vunpack.c.l.b16 %v400
    %v991 = vunpack.c.h.b16 %v400
    %v992 = vunpack.c.l.b16 %v401
    %v993 = vunpack.c.h.b16 %v401
    %v994 = vunpack.c.l.b16 %v402
    %v995 = vunpack.c.h.b16 %v402
    %v996 = vunpack.c.l.b16 %v403
    %v997 = vunpack.c.h.b16 %v403
    %v998 = vunpack.c.l.b16 %v404
    %v999 = vunpack.c.h.b16 %v404
    %v1000 = vunpack.c.l.b16 %v405
    %v1001 = vunpack.c.h.b16 %v405
    %v1002 = vunpack.c.l.b16 %v406
    %v1003 = vunpack.c.h.b16 %v406
    %v1004 = vunpack.c.l.b16 %v407
    %v1005 = vunpack.c.h.b16 %v407
    %v1006 = vunpack.c.l.b16 %v408
    %v1007 = vunpack.c.h.b16 %v408
    %v1008 = vunpack.c.l.b16 %v409
    %v1009 = vunpack.c.h.b16 %v409
    %v1010 = vunpack.c.l.b16 %v410
    %v1011 = vunpack.c.h.b16 %v410
    %v1012 = vunpack.c.l.b16 %v411
    %v1013 = vunpack.c.h.b16 %v411
    %v1014 = vunpack.c.l.b16 %v412
    %v1015 = vunpack.c.h.b16 %v412
    %v1016 = vunpack.c.l.b16 %v413
    %v1017 = vunpack.c.h.b16 %v413
    %v1018 = vunpack.c.l.b16 %v414
    %v1019 = vunpack.c.h.b16 %v414
    %v1020 = vunpack.c.l.b16 %v415
    %v1021 = vunpack.c.h.b16 %v415
    %v1022 = vunpack.c.l.b16 %v416
    %v1023 = vunpack.c.h.b16 %v416
    %v1024 = vunpack.c.l.b16 %v417
    %v1025 = vunpack.c.h.b16 %v417
    %v1026 = vunpack.c.l.b16 %v418
    %v1027 = vunpack.c.h.b16 %v418
    %v1028 = vunpack.c.l.b16 %v419
    %v1029 = vunpack.c.h.b16 %v419
    %v1030 = vpack.c.b16 %v642, %v638
    %v1031 = vpack.c.b16 %v643, %v639
    %v1032 = vpack.c.b16 %v644, %v640
    %v1033 = vpack.c.b16 %v645, %v641
    %v1034 = vpack.c.b16 %v650, %v646
    %v1035 = vpack.c.b16 %v651, %v647
    %v1036 = vpack.c.b16 %v652, %v648
    %v1037 = vpack.c.b16 %v653, %v649
    %v1038 = vpack.c.b16 %v658, %v654
    %v1039 = vpack.c.b16 %v659, %v655
    %v1040 = vpack.c.b16 %v660, %v656
    %v1041 = vpack.c.b16 %v661, %v657
    %v1042 = vpack.c.b16 %v666, %v662
    %v1043 = vpack.c.b16 %v667, %v663
    %v1044 = vpack.c.b16 %v668, %v664
    %v1045 = vpack.c.b16 %v669, %v665
    %v1046 = vpack.c.b16 %v674, %v670
    %v1047 = vpack.c.b16 %v675, %v671
    %v1048 = vpack.c.b16 %v676, %v672
    %v1049 = vpack.c.b16 %v677, %v673
    %v1050 = vpack.c.b16 %v682, %v678
    %v1051 = vpack.c.b16 %v683, %v679
    %v1052 = vpack.c.b16 %v684, %v680
    %v1053 = vpack.c.b16 %v685, %v681
    %v1054 = vpack.c.b16 %v690, %v686
    %v1055 = vpack.c.b16 %v691, %v687
    %v1056 = vpack.c.b16 %v692, %v688
    %v1057 = vpack.c.b16 %v693, %v689
    %v1058 = vpack.c.b16 %v698, %v694
    %v1059 = vpack.c.b16 %v699, %v695
    %v1060 = vpack.c.b16 %v700, %v696
    %v1061 = vpack.c.b16 %v701, %v697
    %v1062 = vpack.c.b16 %v706, %v702
    %v1063 = vpack.c.b16 %v707, %v703
    %v1064 = vpack.c.b16 %v708, %v704
    %v1065 = vpack.c.b16 %v709, %v705
    %v1066 = vpack.c.b16 %v714, %v710
    %v1067 = vpack.c.b16 %v715, %v711
    %v1068 = vpack.c.b16 %v716, %v712
    %v1069 = vpack.c.b16 %v717, %v713
    %v1070 = vpack.c.b16 %v722, %v718
    %v1071 = vpack.c.b16 %v723, %v719
    %v1072 = vpack.c.b16 %v724, %v720
    %v1073 = vpack.c.b16 %v725, %v721
    %v1074 = vpack.c.b16 %v730, %v726
    %v1075 = vpack.c.b16 %v731, %v727
    %v1076 = vpack.c.b16 %v732, %v728
    %v1077 = vpack.c.b16 %v733, %v729
    %v1078 = vpack.c.b16 %v738, %v734
    %v1079 = vpack.c.b16 %v739, %v735
    %v1080 = vpack.c.b16 %v740, %v736
    %v1081 = vpack.c.b16 %v741, %v737
    %v1082 = vpack.c.b16 %v746, %v742
    %v1083 = vpack.c.b16 %v747, %v743
    %v1084 = vpack.c.b16 %v748, %v744
    %v1085 = vpack.c.b16 %v749, %v745
    %v1086 = vpack.c.b16 %v754, %v750
    %v1087 = vpack.c.b16 %v755, %v751
    %v1088 = vpack.c.b16 %v756, %v752
    %v1089 = vpack.c.b16 %v757, %v753
    %v1090 = vpack.c.b16 %v762, %v758
    %v1091 = vpack.c.b16 %v763, %v759
    %v1092 = vpack.c.b16 %v764, %v760
    %v1093 = vpack.c.b16 %v765, %v761
    %v1094 = vpack.c.b16 %v770, %v766
    %v1095 = vpack.c.b16 %v771, %v767
    %v1096 = vpack.c.b16 %v772, %v768
    %v1097 = vpack.c.b16 %v773, %v769
    %v1098 = vpack.c.b16 %v778, %v774
    %v1099 = vpack.c.b16 %v779, %v775
    %v1100 = vpack.c.b16 %v780, %v776
    %v1101 = vpack.c.b16 %v781, %v777
    %v1102 = vpack.c.b16 %v786, %v782
    %v1103 = vpack.c.b16 %v787, %v783
    %v1104 = vpack.c.b16 %v788, %v784
    %v1105 = vpack.c.b16 %v789, %v785
    %v1106 = vpack.c.b16 %v794, %v790
    %v1107 = vpack.c.b16 %v795, %v791
    %v1108 = vpack.c.b16 %v796, %v792
    %v1109 = vpack.c.b16 %v797, %v793
    %v1110 = vpack.c.b16 %v802, %v798
    %v1111 = vpack.c.b16 %v803, %v799
    %v1112 = vpack.c.b16 %v804, %v800
    %v1113 = vpack.c.b16 %v805, %v801
    %v1114 = vpack.c.b16 %v810, %v806
    %v1115 = vpack.c.b16 %v811, %v807
    %v1116 = vpack.c.b16 %v812, %v808
    %v1117 = vpack.c.b16 %v813, %v809
    %v1118 = vpack.c.b16 %v818, %v814
    %v1119 = vpack.c.b16 %v819, %v815
    %v1120 = vpack.c.b16 %v820, %v816
    %v1121 = vpack.c.b16 %v821, %v817
    %v1122 = vpack.c.b16 %v826, %v822
    %v1123 = vpack.c.b16 %v827, %v823
    %v1124 = vpack.c.b16 %v828, %v824
    %v1125 = vpack.c.b16 %v829, %v825
    %v1126 = vpack.c.b16 %v834, %v830
    %v1127 = vpack.c.b16 %v835, %v831
    %v1128 = vpack.c.b16 %v836, %v832
    %v1129 = vpack.c.b16 %v837, %v833
    %v1130 = vpack.c.b16 %v842, %v838
    %v1131 = vpack.c.b16 %v843, %v839
    %v1132 = vpack.c.b16 %v844, %v840
    %v1133 = vpack.c.b16 %v845, %v841
    %v1134 = vpack.c.b16 %v850, %v846
    %v1135 = vpack.c.b16 %v851, %v847
    %v1136 = vpack.c.b16 %v852, %v848
    %v1137 = vpack.c.b16 %v853, %v849
    %v1138 = vpack.c.b16 %v858, %v854
    %v1139 = vpack.c.b16 %v859, %v855
    %v1140 = vpack.c.b16 %v860, %v856
    %v1141 = vpack.c.b16 %v861, %v857
    %v1142 = vpack.c.b16 %v866, %v862
    %v1143 = vpack.c.b16 %v867, %v863
    %v1144 = vpack.c.b16 %v868, %v864
    %v1145 = vpack.c.b16 %v869, %v865
    %v1146 = vpack.c.b16 %v874, %v870
    %v1147 = vpack.c.b16 %v875, %v871
    %v1148 = vpack.c.b16 %v876, %v872
    %v1149 = vpack.c.b16 %v877, %v873
    %v1150 = vpack.c.b16 %v882, %v878
    %v1151 = vpack.c.b16 %v883, %v879
    %v1152 = vpack.c.b16 %v884, %v880
    %v1153 = vpack.c.b16 %v885, %v881
    %v1154 = vpack.c.b16 %v890, %v886
    %v1155 = vpack.c.b16 %v891, %v887
    %v1156 = vpack.c.b16 %v892, %v888
    %v1157 = vpack.c.b16 %v893, %v889
    %v1158 = vpack.c.b16 %v898, %v894
    %v1159 = vpack.c.b16 %v899, %v895
    %v1160 = vpack.c.b16 %v900, %v896
    %v1161 = vpack.c.b16 %v901, %v897
    %v1162 = vpack.c.b16 %v906, %v902
    %v1163 = vpack.c.b16 %v907, %v903
    %v1164 = vpack.c.b16 %v908, %v904
    %v1165 = vpack.c.b16 %v909, %v905
    %v1166 = vpack.c.b16 %v914, %v910
    %v1167 = vpack.c.b16 %v915, %v911
    %v1168 = vpack.c.b16 %v916, %v912
    %v1169 = vpack.c.b16 %v917, %v913
    %v1170 = vpack.c.b16 %v922, %v918
    %v1171 = vpack.c.b16 %v923, %v919
    %v1172 = vpack.c.b16 %v924, %v920
    %v1173 = vpack.c.b16 %v925, %v921
    %v1174 = vpack.c.b16 %v930, %v926
    %v1175 = vpack.c.b16 %v931, %v927
    %v1176 = vpack.c.b16 %v932, %v928
    %v1177 = vpack.c.b16 %v933, %v929
    %v1178 = vpack.c.b16 %v938, %v934
    %v1179 = vpack.c.b16 %v939, %v935
    %v1180 = vpack.c.b16 %v940, %v936
    %v1181 = vpack.c.b16 %v941, %v937
    %v1182 = vpack.c.b16 %v946, %v942
    %v1183 = vpack.c.b16 %v947, %v943
    %v1184 = vpack.c.b16 %v948, %v944
    %v1185 = vpack.c.b16 %v949, %v945
    %v1186 = vpack.c.b16 %v954, %v950
    %v1187 = vpack.c.b16 %v955, %v951
    %v1188 = vpack.c.b16 %v956, %v952
    %v1189 = vpack.c.b16 %v957, %v953
    %v1190 = vpack.c.b16 %v962, %v958
    %v1191 = vpack.c.b16 %v963, %v959
    %v1192 = vpack.c.b16 %v964, %v960
    %v1193 = vpack.c.b16 %v965, %v961
    %v1194 = vpack.c.b16 %v970, %v966
    %v1195 = vpack.c.b16 %v971, %v967
    %v1196 = vpack.c.b16 %v972, %v968
    %v1197 = vpack.c.b16 %v973, %v969
    %v1198 = vpack.c.b16 %v978, %v974
    %v1199 = vpack.c.b16 %v979, %v975
    %v1200 = vpack.c.b16 %v980, %v976
    %v1201 = vpack.c.b16 %v981, %v977
    %v1202 = vpack.c.b16 %v986, %v982
    %v1203 = vpack.c.b16 %v987, %v983
    %v1204 = vpack.c.b16 %v988, %v984
    %v1205 = vpack.c.b16 %v989, %v985
    %v1206 = vpack.c.b16 %v994, %v990
    %v1207 = vpack.c.b16 %v995, %v991
    %v1208 = vpack.c.b16 %v996, %v992
    %v1209 = vpack.c.b16 %v997, %v993
    %v1210 = vpack.c.b16 %v1002, %v998
    %v1211 = vpack.c.b16 %v1003, %v999
    %v1212 = vpack.c.b16 %v1004, %v1000
    %v1213 = vpack.c.b16 %v1005, %v1001
    %v1214 = vpack.c.b16 %v1010, %v1006
    %v1215 = vpack.c.b16 %v1011, %v1007
    %v1216 = vpack.c.b16 %v1012, %v1008
    %v1217 = vpack.c.b16 %v1013, %v1009
    %v1218 = vpack.c.b16 %v1018, %v1014
    %v1219 = vpack.c.b16 %v1019, %v1015
    %v1220 = vpack.c.b16 %v1020, %v1016
    %v1221 = vpack.c.b16 %v1021, %v1017
    %v1222 = vpack.c.b16 %v1026, %v1022
    %v1223 = vpack.c.b16 %v1027, %v1023
    %v1224 = vpack.c.b16 %v1028, %v1024
    %v1225 = vpack.c.b16 %v1029, %v1025
    %vm1422 = vcmask 130048
    %v1424 = vsel %vm1422, %v174, 0
    %v1427 = vsel %vm1422, %v181, 0
    %v1430 = vsel %vm1422, %v188, 0
    %v1433 = vsel %vm1422, %v195, 0
    %v1436 = vsel %vm1422, %v202, 0
    %v1439 = vsel %vm1422, %v209, 0
    %v1442 = vsel %vm1422, %v216, 0
    %v1445 = vsel %vm1422, %v223, 0
    %1447 = vmatprep.subr.bf16.mxu0 %v1059
    %1448 = vmatpush1.bf16.msra.mxu0 %v1058
    %1449 = vmatprep.subr.bf16.mxu0 %v1055
    %1450 = vmatpush1.bf16.msra.mxu0 %v1054
    %1451 = vmatprep.subr.bf16.mxu0 %v1051
    %1452 = vmatpush1.bf16.msra.mxu0 %v1050
    %1453 = vmatprep.subr.bf16.mxu0 %v1047
    %1454 = vmatpush1.bf16.msra.mxu0 %v1046
    %1455 = vmatprep.subr.bf16.mxu0 %v1043
    %1456 = vmatpush1.bf16.msra.mxu0 %v1042
    %1457 = vmatprep.subr.bf16.mxu0 %v1039
    %1458 = vmatpush1.bf16.msra.mxu0 %v1038
    %1459 = vmatprep.subr.bf16.mxu0 %v1035
    %1460 = vmatpush1.bf16.msra.mxu0 %v1034
    %1461 = vmatprep.subr.bf16.mxu0 %v1031
    %1462 = vmatpush1.bf16.msra.mxu0 %v1030
    %1463 = vmatprep.subr.bf16.mxu0 %v1091
    %1464 = vmatpush2.bf16.msra.mxu0 %v1090
    %1465 = vmatprep.subr.bf16.mxu0 %v1087
    %1466 = vmatpush2.bf16.msra.mxu0 %v1086
    %1467 = vmatprep.subr.bf16.mxu0 %v1083
    %1468 = vmatpush2.bf16.msra.mxu0 %v1082
    %1469 = vmatprep.subr.bf16.mxu0 %v1079
    %1470 = vmatpush2.bf16.msra.mxu0 %v1078
    %1471 = vmatprep.subr.bf16.mxu0 %v1075
    %1472 = vmatpush2.bf16.msra.mxu0 %v1074
    %1473 = vmatprep.subr.bf16.mxu0 %v1071
    %1474 = vmatpush2.bf16.msra.mxu0 %v1070
    %1475 = vmatprep.subr.bf16.mxu0 %v1067
    %1476 = vmatpush2.bf16.msra.mxu0 %v1066
    %1477 = vmatprep.subr.bf16.mxu0 %v1063
    %1478 = vmatpush2.bf16.msra.mxu0 %v1062
    %1479 = vmatprep.mubr.bf16.mxu0 %v169
    %1480 = vmatmul.mubr.bf16.gmra.mxu0 %v168
    %v1481 = vpop.f32.mrf.mxu0
    %v1482 = vadd.f32 %v425, %v1481
    %v1483 = vpop.f32.mrf.mxu0
    %v1484 = vadd.f32 %v429, %v1483
    %v1485 = vpop.f32.mrf.mxu0
    %v1486 = vadd.f32 %v425, %v1485
    %v1487 = vpop.f32.mrf.mxu0
    %v1488 = vadd.f32 %v429, %v1487
    %1489 = vmatprep.mubr.bf16.mxu0 %v176
    %1490 = vmatmul.mubr.bf16.gmra.mxu0 %v175
    %v1491 = vpop.f32.mrf.mxu0
    %v1492 = vadd.f32 %v425, %v1491
    %v1493 = vpop.f32.mrf.mxu0
    %v1494 = vadd.f32 %v429, %v1493
    %v1495 = vpop.f32.mrf.mxu0
    %v1496 = vadd.f32 %v425, %v1495
    %v1497 = vpop.f32.mrf.mxu0
    %v1498 = vadd.f32 %v429, %v1497
    %1499 = vmatprep.mubr.bf16.mxu0 %v183
    %1500 = vmatmul.mubr.bf16.gmra.mxu0 %v182
    %v1501 = vpop.f32.mrf.mxu0
    %v1502 = vadd.f32 %v425, %v1501
    %v1503 = vpop.f32.mrf.mxu0
    %v1504 = vadd.f32 %v429, %v1503
    %v1505 = vpop.f32.mrf.mxu0
    %v1506 = vadd.f32 %v425, %v1505
    %v1507 = vpop.f32.mrf.mxu0
    %v1508 = vadd.f32 %v429, %v1507
    %1509 = vmatprep.mubr.bf16.mxu0 %v190
    %1510 = vmatmul.mubr.bf16.gmra.mxu0 %v189
    %v1511 = vpop.f32.mrf.mxu0
    %v1512 = vadd.f32 %v425, %v1511
    %v1513 = vpop.f32.mrf.mxu0
    %v1514 = vadd.f32 %v429, %v1513
    %v1515 = vpop.f32.mrf.mxu0
    %v1516 = vadd.f32 %v425, %v1515
    %v1517 = vpop.f32.mrf.mxu0
    %v1518 = vadd.f32 %v429, %v1517
    %1519 = vmatprep.mubr.bf16.mxu0 %v197
    %1520 = vmatmul.mubr.bf16.gmra.mxu0 %v196
    %v1521 = vpop.f32.mrf.mxu0
    %v1522 = vadd.f32 %v425, %v1521
    %v1523 = vpop.f32.mrf.mxu0
    %v1524 = vadd.f32 %v429, %v1523
    %v1525 = vpop.f32.mrf.mxu0
    %v1526 = vadd.f32 %v425, %v1525
    %v1527 = vpop.f32.mrf.mxu0
    %v1528 = vadd.f32 %v429, %v1527
    %1529 = vmatprep.mubr.bf16.mxu0 %v204
    %1530 = vmatmul.mubr.bf16.gmra.mxu0 %v203
    %v1531 = vpop.f32.mrf.mxu0
    %v1532 = vadd.f32 %v425, %v1531
    %v1533 = vpop.f32.mrf.mxu0
    %v1534 = vadd.f32 %v429, %v1533
    %v1535 = vpop.f32.mrf.mxu0
    %v1536 = vadd.f32 %v425, %v1535
    %v1537 = vpop.f32.mrf.mxu0
    %v1538 = vadd.f32 %v429, %v1537
    %1539 = vmatprep.mubr.bf16.mxu0 %v211
    %1540 = vmatmul.mubr.bf16.gmra.mxu0 %v210
    %v1541 = vpop.f32.mrf.mxu0
    %v1542 = vadd.f32 %v425, %v1541
    %v1543 = vpop.f32.mrf.mxu0
    %v1544 = vadd.f32 %v429, %v1543
    %v1545 = vpop.f32.mrf.mxu0
    %v1546 = vadd.f32 %v425, %v1545
    %v1547 = vpop.f32.mrf.mxu0
    %v1548 = vadd.f32 %v429, %v1547
    %1549 = vmatprep.mubr.bf16.mxu0 %v218
    %1550 = vmatmul.mubr.bf16.gmra.mxu0 %v217
    %v1551 = vpop.f32.mrf.mxu0
    %v1552 = vadd.f32 %v425, %v1551
    %v1553 = vpop.f32.mrf.mxu0
    %v1554 = vadd.f32 %v429, %v1553
    %v1555 = vpop.f32.mrf.mxu0
    %v1556 = vadd.f32 %v425, %v1555
    %v1557 = vpop.f32.mrf.mxu0
    %v1558 = vadd.f32 %v429, %v1557
    %1559 = vdwg.mxu0
    %1560 = vmatprep.subr.bf16.mxu0 %v1123
    %1561 = vmatpush1.bf16.msra.mxu0 %v1122
    %1562 = vmatprep.subr.bf16.mxu0 %v1119
    %1563 = vmatpush1.bf16.msra.mxu0 %v1118
    %1564 = vmatprep.subr.bf16.mxu0 %v1115
    %1565 = vmatpush1.bf16.msra.mxu0 %v1114
    %1566 = vmatprep.subr.bf16.mxu0 %v1111
    %1567 = vmatpush1.bf16.msra.mxu0 %v1110
    %1568 = vmatprep.subr.bf16.mxu0 %v1107
    %1569 = vmatpush1.bf16.msra.mxu0 %v1106
    %1570 = vmatprep.subr.bf16.mxu0 %v1103
    %1571 = vmatpush1.bf16.msra.mxu0 %v1102
    %1572 = vmatprep.subr.bf16.mxu0 %v1099
    %1573 = vmatpush1.bf16.msra.mxu0 %v1098
    %1574 = vmatprep.subr.bf16.mxu0 %v1095
    %1575 = vmatpush1.bf16.msra.mxu0 %v1094
    %1576 = vmatprep.subr.bf16.mxu0 %v1155
    %1577 = vmatpush2.bf16.msra.mxu0 %v1154
    %1578 = vmatprep.subr.bf16.mxu0 %v1151
    %1579 = vmatpush2.bf16.msra.mxu0 %v1150
    %1580 = vmatprep.subr.bf16.mxu0 %v1147
    %1581 = vmatpush2.bf16.msra.mxu0 %v1146
    %1582 = vmatprep.subr.bf16.mxu0 %v1143
    %1583 = vmatpush2.bf16.msra.mxu0 %v1142
    %1584 = vmatprep.subr.bf16.mxu0 %v1139
    %1585 = vmatpush2.bf16.msra.mxu0 %v1138
    %1586 = vmatprep.subr.bf16.mxu0 %v1135
    %1587 = vmatpush2.bf16.msra.mxu0 %v1134
    %1588 = vmatprep.subr.bf16.mxu0 %v1131
    %1589 = vmatpush2.bf16.msra.mxu0 %v1130
    %1590 = vmatprep.subr.bf16.mxu0 %v1127
    %1591 = vmatpush2.bf16.msra.mxu0 %v1126
    %1592 = vmatprep.mubr.bf16.mxu0 %v171
    %1593 = vmatmul.mubr.bf16.gmra.mxu0 %v170
    %v1594 = vpop.f32.mrf.mxu0
    %v1595 = vadd.f32 %v1482, %v1594
    %v1596 = vpop.f32.mrf.mxu0
    %v1597 = vadd.f32 %v1484, %v1596
    %v1598 = vpop.f32.mrf.mxu0
    %v1599 = vadd.f32 %v1486, %v1598
    %v1600 = vpop.f32.mrf.mxu0
    %v1601 = vadd.f32 %v1488, %v1600
    %1602 = vmatprep.mubr.bf16.mxu0 %v178
    %1603 = vmatmul.mubr.bf16.gmra.mxu0 %v177
    %v1604 = vpop.f32.mrf.mxu0
    %v1605 = vadd.f32 %v1492, %v1604
    %v1606 = vpop.f32.mrf.mxu0
    %v1607 = vadd.f32 %v1494, %v1606
    %v1608 = vpop.f32.mrf.mxu0
    %v1609 = vadd.f32 %v1496, %v1608
    %v1610 = vpop.f32.mrf.mxu0
    %v1611 = vadd.f32 %v1498, %v1610
    %1612 = vmatprep.mubr.bf16.mxu0 %v185
    %1613 = vmatmul.mubr.bf16.gmra.mxu0 %v184
    %v1614 = vpop.f32.mrf.mxu0
    %v1615 = vadd.f32 %v1502, %v1614
    %v1616 = vpop.f32.mrf.mxu0
    %v1617 = vadd.f32 %v1504, %v1616
    %v1618 = vpop.f32.mrf.mxu0
    %v1619 = vadd.f32 %v1506, %v1618
    %v1620 = vpop.f32.mrf.mxu0
    %v1621 = vadd.f32 %v1508, %v1620
    %1622 = vmatprep.mubr.bf16.mxu0 %v192
    %1623 = vmatmul.mubr.bf16.gmra.mxu0 %v191
    %v1624 = vpop.f32.mrf.mxu0
    %v1625 = vadd.f32 %v1512, %v1624
    %v1626 = vpop.f32.mrf.mxu0
    %v1627 = vadd.f32 %v1514, %v1626
    %v1628 = vpop.f32.mrf.mxu0
    %v1629 = vadd.f32 %v1516, %v1628
    %v1630 = vpop.f32.mrf.mxu0
    %v1631 = vadd.f32 %v1518, %v1630
    %1632 = vmatprep.mubr.bf16.mxu0 %v199
    %1633 = vmatmul.mubr.bf16.gmra.mxu0 %v198
    %v1634 = vpop.f32.mrf.mxu0
    %v1635 = vadd.f32 %v1522, %v1634
    %v1636 = vpop.f32.mrf.mxu0
    %v1637 = vadd.f32 %v1524, %v1636
    %v1638 = vpop.f32.mrf.mxu0
    %v1639 = vadd.f32 %v1526, %v1638
    %v1640 = vpop.f32.mrf.mxu0
    %v1641 = vadd.f32 %v1528, %v1640
    %1642 = vmatprep.mubr.bf16.mxu0 %v206
    %1643 = vmatmul.mubr.bf16.gmra.mxu0 %v205
    %v1644 = vpop.f32.mrf.mxu0
    %v1645 = vadd.f32 %v1532, %v1644
    %v1646 = vpop.f32.mrf.mxu0
    %v1647 = vadd.f32 %v1534, %v1646
    %v1648 = vpop.f32.mrf.mxu0
    %v1649 = vadd.f32 %v1536, %v1648
    %v1650 = vpop.f32.mrf.mxu0
    %v1651 = vadd.f32 %v1538, %v1650
    %1652 = vmatprep.mubr.bf16.mxu0 %v213
    %1653 = vmatmul.mubr.bf16.gmra.mxu0 %v212
    %v1654 = vpop.f32.mrf.mxu0
    %v1655 = vadd.f32 %v1542, %v1654
    %v1656 = vpop.f32.mrf.mxu0
    %v1657 = vadd.f32 %v1544, %v1656
    %v1658 = vpop.f32.mrf.mxu0
    %v1659 = vadd.f32 %v1546, %v1658
    %v1660 = vpop.f32.mrf.mxu0
    %v1661 = vadd.f32 %v1548, %v1660
    %1662 = vmatprep.mubr.bf16.mxu0 %v220
    %1663 = vmatmul.mubr.bf16.gmra.mxu0 %v219
    %v1664 = vpop.f32.mrf.mxu0
    %v1665 = vadd.f32 %v1552, %v1664
    %v1666 = vpop.f32.mrf.mxu0
    %v1667 = vadd.f32 %v1554, %v1666
    %v1668 = vpop.f32.mrf.mxu0
    %v1669 = vadd.f32 %v1556, %v1668
    %v1670 = vpop.f32.mrf.mxu0
    %v1671 = vadd.f32 %v1558, %v1670
    %1672 = vdwg.mxu0
    %1673 = vmatprep.subr.bf16.mxu0 %v1187
    %1674 = vmatpush1.bf16.msra.mxu0 %v1186
    %1675 = vmatprep.subr.bf16.mxu0 %v1183
    %1676 = vmatpush1.bf16.msra.mxu0 %v1182
    %1677 = vmatprep.subr.bf16.mxu0 %v1179
    %1678 = vmatpush1.bf16.msra.mxu0 %v1178
    %1679 = vmatprep.subr.bf16.mxu0 %v1175
    %1680 = vmatpush1.bf16.msra.mxu0 %v1174
    %1681 = vmatprep.subr.bf16.mxu0 %v1171
    %1682 = vmatpush1.bf16.msra.mxu0 %v1170
    %1683 = vmatprep.subr.bf16.mxu0 %v1167
    %1684 = vmatpush1.bf16.msra.mxu0 %v1166
    %1685 = vmatprep.subr.bf16.mxu0 %v1163
    %1686 = vmatpush1.bf16.msra.mxu0 %v1162
    %1687 = vmatprep.subr.bf16.mxu0 %v1159
    %1688 = vmatpush1.bf16.msra.mxu0 %v1158
    %1689 = vmatprep.subr.bf16.mxu0 %v1219
    %1690 = vmatpush2.bf16.msra.mxu0 %v1218
    %1691 = vmatprep.subr.bf16.mxu0 %v1215
    %1692 = vmatpush2.bf16.msra.mxu0 %v1214
    %1693 = vmatprep.subr.bf16.mxu0 %v1211
    %1694 = vmatpush2.bf16.msra.mxu0 %v1210
    %1695 = vmatprep.subr.bf16.mxu0 %v1207
    %1696 = vmatpush2.bf16.msra.mxu0 %v1206
    %1697 = vmatprep.subr.bf16.mxu0 %v1203
    %1698 = vmatpush2.bf16.msra.mxu0 %v1202
    %1699 = vmatprep.subr.bf16.mxu0 %v1199
    %1700 = vmatpush2.bf16.msra.mxu0 %v1198
    %1701 = vmatprep.subr.bf16.mxu0 %v1195
    %1702 = vmatpush2.bf16.msra.mxu0 %v1194
    %1703 = vmatprep.subr.bf16.mxu0 %v1191
    %1704 = vmatpush2.bf16.msra.mxu0 %v1190
    %1705 = vmatprep.mubr.bf16.mxu0 %v173
    %1706 = vmatmul.mubr.bf16.gmra.mxu0 %v172
    %v1707 = vpop.f32.mrf.mxu0
    %v1708 = vadd.f32 %v1595, %v1707
    %v1709 = vpop.f32.mrf.mxu0
    %v1710 = vadd.f32 %v1597, %v1709
    %v1711 = vpop.f32.mrf.mxu0
    %v1712 = vadd.f32 %v1599, %v1711
    %v1713 = vpop.f32.mrf.mxu0
    %v1714 = vadd.f32 %v1601, %v1713
    %1715 = vmatprep.mubr.bf16.mxu0 %v180
    %1716 = vmatmul.mubr.bf16.gmra.mxu0 %v179
    %v1717 = vpop.f32.mrf.mxu0
    %v1718 = vadd.f32 %v1605, %v1717
    %v1719 = vpop.f32.mrf.mxu0
    %v1720 = vadd.f32 %v1607, %v1719
    %v1721 = vpop.f32.mrf.mxu0
    %v1722 = vadd.f32 %v1609, %v1721
    %v1723 = vpop.f32.mrf.mxu0
    %v1724 = vadd.f32 %v1611, %v1723
    %1725 = vmatprep.mubr.bf16.mxu0 %v187
    %1726 = vmatmul.mubr.bf16.gmra.mxu0 %v186
    %v1727 = vpop.f32.mrf.mxu0
    %v1728 = vadd.f32 %v1615, %v1727
    %v1729 = vpop.f32.mrf.mxu0
    %v1730 = vadd.f32 %v1617, %v1729
    %v1731 = vpop.f32.mrf.mxu0
    %v1732 = vadd.f32 %v1619, %v1731
    %v1733 = vpop.f32.mrf.mxu0
    %v1734 = vadd.f32 %v1621, %v1733
    %1735 = vmatprep.mubr.bf16.mxu0 %v194
    %1736 = vmatmul.mubr.bf16.gmra.mxu0 %v193
    %v1737 = vpop.f32.mrf.mxu0
    %v1738 = vadd.f32 %v1625, %v1737
    %v1739 = vpop.f32.mrf.mxu0
    %v1740 = vadd.f32 %v1627, %v1739
    %v1741 = vpop.f32.mrf.mxu0
    %v1742 = vadd.f32 %v1629, %v1741
    %v1743 = vpop.f32.mrf.mxu0
    %v1744 = vadd.f32 %v1631, %v1743
    %1745 = vmatprep.mubr.bf16.mxu0 %v201
    %1746 = vmatmul.mubr.bf16.gmra.mxu0 %v200
    %v1747 = vpop.f32.mrf.mxu0
    %v1748 = vadd.f32 %v1635, %v1747
    %v1749 = vpop.f32.mrf.mxu0
    %v1750 = vadd.f32 %v1637, %v1749
    %v1751 = vpop.f32.mrf.mxu0
    %v1752 = vadd.f32 %v1639, %v1751
    %v1753 = vpop.f32.mrf.mxu0
    %v1754 = vadd.f32 %v1641, %v1753
    %1755 = vmatprep.mubr.bf16.mxu0 %v208
    %1756 = vmatmul.mubr.bf16.gmra.mxu0 %v207
    %v1757 = vpop.f32.mrf.mxu0
    %v1758 = vadd.f32 %v1645, %v1757
    %v1759 = vpop.f32.mrf.mxu0
    %v1760 = vadd.f32 %v1647, %v1759
    %v1761 = vpop.f32.mrf.mxu0
    %v1762 = vadd.f32 %v1649, %v1761
    %v1763 = vpop.f32.mrf.mxu0
    %v1764 = vadd.f32 %v1651, %v1763
    %1765 = vmatprep.mubr.bf16.mxu0 %v215
    %1766 = vmatmul.mubr.bf16.gmra.mxu0 %v214
    %v1767 = vpop.f32.mrf.mxu0
    %v1768 = vadd.f32 %v1655, %v1767
    %v1769 = vpop.f32.mrf.mxu0
    %v1770 = vadd.f32 %v1657, %v1769
    %v1771 = vpop.f32.mrf.mxu0
    %v1772 = vadd.f32 %v1659, %v1771
    %v1773 = vpop.f32.mrf.mxu0
    %v1774 = vadd.f32 %v1661, %v1773
    %1775 = vmatprep.mubr.bf16.mxu0 %v222
    %1776 = vmatmul.mubr.bf16.gmra.mxu0 %v221
    %v1777 = vpop.f32.mrf.mxu0
    %v1778 = vadd.f32 %v1665, %v1777
    %v1779 = vpop.f32.mrf.mxu0
    %v1780 = vadd.f32 %v1667, %v1779
    %v1781 = vpop.f32.mrf.mxu0
    %v1782 = vadd.f32 %v1669, %v1781
    %v1783 = vpop.f32.mrf.mxu0
    %v1784 = vadd.f32 %v1671, %v1783
    %1785 = vdwg.mxu0
    %1786 = vmatprep.subr.bf16.mxu0 0
    %1787 = vmatpush1.bf16.msra.mxu0 0
    %1788 = vmatprep.subr.bf16.mxu0 0
    %1789 = vmatpush1.bf16.msra.mxu0 0
    %1790 = vmatprep.subr.bf16.mxu0 0
    %1791 = vmatpush1.bf16.msra.mxu0 0
    %1792 = vmatprep.subr.bf16.mxu0 0
    %1793 = vmatpush1.bf16.msra.mxu0 0
    %1794 = vmatprep.subr.bf16.mxu0 0
    %1795 = vmatpush1.bf16.msra.mxu0 0
    %1796 = vmatprep.subr.bf16.mxu0 0
    %1797 = vmatpush1.bf16.msra.mxu0 0
    %1798 = vmatprep.subr.bf16.mxu0 0
    %1799 = vmatpush1.bf16.msra.mxu0 0
    %1800 = vmatprep.subr.bf16.mxu0 %v1223
    %1801 = vmatpush1.bf16.msra.mxu0 %v1222
    %1802 = vmatprep.subr.bf16.mxu0 0
    %1803 = vmatpush2.bf16.msra.mxu0 0
    %1804 = vmatprep.subr.bf16.mxu0 0
    %1805 = vmatpush2.bf16.msra.mxu0 0
    %1806 = vmatprep.subr.bf16.mxu0 0
    %1807 = vmatpush2.bf16.msra.mxu0 0
    %1808 = vmatprep.subr.bf16.mxu0 0
    %1809 = vmatpush2.bf16.msra.mxu0 0
    %1810 = vmatprep.subr.bf16.mxu0 0
    %1811 = vmatpush2.bf16.msra.mxu0 0
    %1812 = vmatprep.subr.bf16.mxu0 0
    %1813 = vmatpush2.bf16.msra.mxu0 0
    %1814 = vmatprep.subr.bf16.mxu0 0
    %1815 = vmatpush2.bf16.msra.mxu0 0
    %1816 = vmatprep.subr.bf16.mxu0 0
    %1817 = vmatpush2.bf16.msra.mxu0 0
    %1818 = vmatprep.mubr.bf16.mxu0 0
    %1819 = vmatmul.mubr.bf16.gmra.mxu0 %v1424
    %v1820 = vpop.f32.mrf.mxu0
    %v1821 = vadd.f32 %v1708, %v1820
    %v1822 = vpop.f32.mrf.mxu0
    %v1823 = vadd.f32 %v1710, %v1822
    %v1824 = vpop.f32.mrf.mxu0
    %v1825 = vadd.f32 %v1712, %v1824
    %v1826 = vpop.f32.mrf.mxu0
    %v1827 = vadd.f32 %v1714, %v1826
    %1828 = vmatprep.mubr.bf16.mxu0 0
    %1829 = vmatmul.mubr.bf16.gmra.mxu0 %v1427
    %v1830 = vpop.f32.mrf.mxu0
    %v1831 = vadd.f32 %v1718, %v1830
    %v1832 = vpop.f32.mrf.mxu0
    %v1833 = vadd.f32 %v1720, %v1832
    %v1834 = vpop.f32.mrf.mxu0
    %v1835 = vadd.f32 %v1722, %v1834
    %v1836 = vpop.f32.mrf.mxu0
    %v1837 = vadd.f32 %v1724, %v1836
    %1838 = vmatprep.mubr.bf16.mxu0 0
    %1839 = vmatmul.mubr.bf16.gmra.mxu0 %v1430
    %v1840 = vpop.f32.mrf.mxu0
    %v1841 = vadd.f32 %v1728, %v1840
    %v1842 = vpop.f32.mrf.mxu0
    %v1843 = vadd.f32 %v1730, %v1842
    %v1844 = vpop.f32.mrf.mxu0
    %v1845 = vadd.f32 %v1732, %v1844
    %v1846 = vpop.f32.mrf.mxu0
    %v1847 = vadd.f32 %v1734, %v1846
    %1848 = vmatprep.mubr.bf16.mxu0 0
    %1849 = vmatmul.mubr.bf16.gmra.mxu0 %v1433
    %v1850 = vpop.f32.mrf.mxu0
    %v1851 = vadd.f32 %v1738, %v1850
    %v1852 = vpop.f32.mrf.mxu0
    %v1853 = vadd.f32 %v1740, %v1852
    %v1854 = vpop.f32.mrf.mxu0
    %v1855 = vadd.f32 %v1742, %v1854
    %v1856 = vpop.f32.mrf.mxu0
    %v1857 = vadd.f32 %v1744, %v1856
    %1858 = vmatprep.mubr.bf16.mxu0 0
    %1859 = vmatmul.mubr.bf16.gmra.mxu0 %v1436
    %v1860 = vpop.f32.mrf.mxu0
    %v1861 = vadd.f32 %v1748, %v1860
    %v1862 = vpop.f32.mrf.mxu0
    %v1863 = vadd.f32 %v1750, %v1862
    %v1864 = vpop.f32.mrf.mxu0
    %v1865 = vadd.f32 %v1752, %v1864
    %v1866 = vpop.f32.mrf.mxu0
    %v1867 = vadd.f32 %v1754, %v1866
    %1868 = vmatprep.mubr.bf16.mxu0 0
    %1869 = vmatmul.mubr.bf16.gmra.mxu0 %v1439
    %v1870 = vpop.f32.mrf.mxu0
    %v1871 = vadd.f32 %v1758, %v1870
    %v1872 = vpop.f32.mrf.mxu0
    %v1873 = vadd.f32 %v1760, %v1872
    %v1874 = vpop.f32.mrf.mxu0
    %v1875 = vadd.f32 %v1762, %v1874
    %v1876 = vpop.f32.mrf.mxu0
    %v1877 = vadd.f32 %v1764, %v1876
    %1878 = vmatprep.mubr.bf16.mxu0 0
    %1879 = vmatmul.mubr.bf16.gmra.mxu0 %v1442
    %v1880 = vpop.f32.mrf.mxu0
    %v1881 = vadd.f32 %v1768, %v1880
    %v1882 = vpop.f32.mrf.mxu0
    %v1883 = vadd.f32 %v1770, %v1882
    %v1884 = vpop.f32.mrf.mxu0
    %v1885 = vadd.f32 %v1772, %v1884
    %v1886 = vpop.f32.mrf.mxu0
    %v1887 = vadd.f32 %v1774, %v1886
    %1888 = vmatprep.mubr.bf16.mxu0 0
    %1889 = vmatmul.mubr.bf16.gmra.mxu0 %v1445
    %v1890 = vpop.f32.mrf.mxu0
    %v1891 = vadd.f32 %v1778, %v1890
    %v1892 = vpop.f32.mrf.mxu0
    %v1893 = vadd.f32 %v1780, %v1892
    %v1894 = vpop.f32.mrf.mxu0
    %v1895 = vadd.f32 %v1782, %v1894
    %v1896 = vpop.f32.mrf.mxu0
    %v1897 = vadd.f32 %v1784, %v1896
    %1898 = vdwg.mxu0
    %1899 = vmatprep.subr.bf16.mxu0 %v1061
    %1900 = vmatpush1.bf16.msra.mxu0 %v1060
    %1901 = vmatprep.subr.bf16.mxu0 %v1057
    %1902 = vmatpush1.bf16.msra.mxu0 %v1056
    %1903 = vmatprep.subr.bf16.mxu0 %v1053
    %1904 = vmatpush1.bf16.msra.mxu0 %v1052
    %1905 = vmatprep.subr.bf16.mxu0 %v1049
    %1906 = vmatpush1.bf16.msra.mxu0 %v1048
    %1907 = vmatprep.subr.bf16.mxu0 %v1045
    %1908 = vmatpush1.bf16.msra.mxu0 %v1044
    %1909 = vmatprep.subr.bf16.mxu0 %v1041
    %1910 = vmatpush1.bf16.msra.mxu0 %v1040
    %1911 = vmatprep.subr.bf16.mxu0 %v1037
    %1912 = vmatpush1.bf16.msra.mxu0 %v1036
    %1913 = vmatprep.subr.bf16.mxu0 %v1033
    %1914 = vmatpush1.bf16.msra.mxu0 %v1032
    %1915 = vmatprep.subr.bf16.mxu0 %v1093
    %1916 = vmatpush2.bf16.msra.mxu0 %v1092
    %1917 = vmatprep.subr.bf16.mxu0 %v1089
    %1918 = vmatpush2.bf16.msra.mxu0 %v1088
    %1919 = vmatprep.subr.bf16.mxu0 %v1085
    %1920 = vmatpush2.bf16.msra.mxu0 %v1084
    %1921 = vmatprep.subr.bf16.mxu0 %v1081
    %1922 = vmatpush2.bf16.msra.mxu0 %v1080
    %1923 = vmatprep.subr.bf16.mxu0 %v1077
    %1924 = vmatpush2.bf16.msra.mxu0 %v1076
    %1925 = vmatprep.subr.bf16.mxu0 %v1073
    %1926 = vmatpush2.bf16.msra.mxu0 %v1072
    %1927 = vmatprep.subr.bf16.mxu0 %v1069
    %1928 = vmatpush2.bf16.msra.mxu0 %v1068
    %1929 = vmatprep.subr.bf16.mxu0 %v1065
    %1930 = vmatpush2.bf16.msra.mxu0 %v1064
    %1931 = vmatprep.mubr.bf16.mxu0 %v169
    %1932 = vmatmul.mubr.bf16.gmra.mxu0 %v168
    %v1933 = vpop.f32.mrf.mxu0
    %v1934 = vadd.f32 %v433, %v1933
    %v1935 = vpop.f32.mrf.mxu0
    %v1936 = vadd.f32 %v437, %v1935
    %v1937 = vpop.f32.mrf.mxu0
    %v1938 = vadd.f32 %v433, %v1937
    %v1939 = vpop.f32.mrf.mxu0
    %v1940 = vadd.f32 %v437, %v1939
    %1941 = vmatprep.mubr.bf16.mxu0 %v176
    %1942 = vmatmul.mubr.bf16.gmra.mxu0 %v175
    %v1943 = vpop.f32.mrf.mxu0
    %v1944 = vadd.f32 %v433, %v1943
    %v1945 = vpop.f32.mrf.mxu0
    %v1946 = vadd.f32 %v437, %v1945
    %v1947 = vpop.f32.mrf.mxu0
    %v1948 = vadd.f32 %v433, %v1947
    %v1949 = vpop.f32.mrf.mxu0
    %v1950 = vadd.f32 %v437, %v1949
    %1951 = vmatprep.mubr.bf16.mxu0 %v183
    %1952 = vmatmul.mubr.bf16.gmra.mxu0 %v182
    %v1953 = vpop.f32.mrf.mxu0
    %v1954 = vadd.f32 %v433, %v1953
    %v1955 = vpop.f32.mrf.mxu0
    %v1956 = vadd.f32 %v437, %v1955
    %v1957 = vpop.f32.mrf.mxu0
    %v1958 = vadd.f32 %v433, %v1957
    %v1959 = vpop.f32.mrf.mxu0
    %v1960 = vadd.f32 %v437, %v1959
    %1961 = vmatprep.mubr.bf16.mxu0 %v190
    %1962 = vmatmul.mubr.bf16.gmra.mxu0 %v189
    %v1963 = vpop.f32.mrf.mxu0
    %v1964 = vadd.f32 %v433, %v1963
    %v1965 = vpop.f32.mrf.mxu0
    %v1966 = vadd.f32 %v437, %v1965
    %v1967 = vpop.f32.mrf.mxu0
    %v1968 = vadd.f32 %v433, %v1967
    %v1969 = vpop.f32.mrf.mxu0
    %v1970 = vadd.f32 %v437, %v1969
    %1971 = vmatprep.mubr.bf16.mxu0 %v197
    %1972 = vmatmul.mubr.bf16.gmra.mxu0 %v196
    %v1973 = vpop.f32.mrf.mxu0
    %v1974 = vadd.f32 %v433, %v1973
    %v1975 = vpop.f32.mrf.mxu0
    %v1976 = vadd.f32 %v437, %v1975
    %v1977 = vpop.f32.mrf.mxu0
    %v1978 = vadd.f32 %v433, %v1977
    %v1979 = vpop.f32.mrf.mxu0
    %v1980 = vadd.f32 %v437, %v1979
    %1981 = vmatprep.mubr.bf16.mxu0 %v204
    %1982 = vmatmul.mubr.bf16.gmra.mxu0 %v203
    %v1983 = vpop.f32.mrf.mxu0
    %v1984 = vadd.f32 %v433, %v1983
    %v1985 = vpop.f32.mrf.mxu0
    %v1986 = vadd.f32 %v437, %v1985
    %v1987 = vpop.f32.mrf.mxu0
    %v1988 = vadd.f32 %v433, %v1987
    %v1989 = vpop.f32.mrf.mxu0
    %v1990 = vadd.f32 %v437, %v1989
    %1991 = vmatprep.mubr.bf16.mxu0 %v211
    %1992 = vmatmul.mubr.bf16.gmra.mxu0 %v210
    %v1993 = vpop.f32.mrf.mxu0
    %v1994 = vadd.f32 %v433, %v1993
    %v1995 = vpop.f32.mrf.mxu0
    %v1996 = vadd.f32 %v437, %v1995
    %v1997 = vpop.f32.mrf.mxu0
    %v1998 = vadd.f32 %v433, %v1997
    %v1999 = vpop.f32.mrf.mxu0
    %v2000 = vadd.f32 %v437, %v1999
    %2001 = vmatprep.mubr.bf16.mxu0 %v218
    %2002 = vmatmul.mubr.bf16.gmra.mxu0 %v217
    %v2003 = vpop.f32.mrf.mxu0
    %v2004 = vadd.f32 %v433, %v2003
    %v2005 = vpop.f32.mrf.mxu0
    %v2006 = vadd.f32 %v437, %v2005
    %v2007 = vpop.f32.mrf.mxu0
    %v2008 = vadd.f32 %v433, %v2007
    %v2009 = vpop.f32.mrf.mxu0
    %v2010 = vadd.f32 %v437, %v2009
    %2011 = vdwg.mxu0
    %2012 = vmatprep.subr.bf16.mxu0 %v1125
    %2013 = vmatpush1.bf16.msra.mxu0 %v1124
    %2014 = vmatprep.subr.bf16.mxu0 %v1121
    %2015 = vmatpush1.bf16.msra.mxu0 %v1120
    %2016 = vmatprep.subr.bf16.mxu0 %v1117
    %2017 = vmatpush1.bf16.msra.mxu0 %v1116
    %2018 = vmatprep.subr.bf16.mxu0 %v1113
    %2019 = vmatpush1.bf16.msra.mxu0 %v1112
    %2020 = vmatprep.subr.bf16.mxu0 %v1109
    %2021 = vmatpush1.bf16.msra.mxu0 %v1108
    %2022 = vmatprep.subr.bf16.mxu0 %v1105
    %2023 = vmatpush1.bf16.msra.mxu0 %v1104
    %2024 = vmatprep.subr.bf16.mxu0 %v1101
    %2025 = vmatpush1.bf16.msra.mxu0 %v1100
    %2026 = vmatprep.subr.bf16.mxu0 %v1097
    %2027 = vmatpush1.bf16.msra.mxu0 %v1096
    %2028 = vmatprep.subr.bf16.mxu0 %v1157
    %2029 = vmatpush2.bf16.msra.mxu0 %v1156
    %2030 = vmatprep.subr.bf16.mxu0 %v1153
    %2031 = vmatpush2.bf16.msra.mxu0 %v1152
    %2032 = vmatprep.subr.bf16.mxu0 %v1149
    %2033 = vmatpush2.bf16.msra.mxu0 %v1148
    %2034 = vmatprep.subr.bf16.mxu0 %v1145
    %2035 = vmatpush2.bf16.msra.mxu0 %v1144
    %2036 = vmatprep.subr.bf16.mxu0 %v1141
    %2037 = vmatpush2.bf16.msra.mxu0 %v1140
    %2038 = vmatprep.subr.bf16.mxu0 %v1137
    %2039 = vmatpush2.bf16.msra.mxu0 %v1136
    %2040 = vmatprep.subr.bf16.mxu0 %v1133
    %2041 = vmatpush2.bf16.msra.mxu0 %v1132
    %2042 = vmatprep.subr.bf16.mxu0 %v1129
    %2043 = vmatpush2.bf16.msra.mxu0 %v1128
    %2044 = vmatprep.mubr.bf16.mxu0 %v171
    %2045 = vmatmul.mubr.bf16.gmra.mxu0 %v170
    %v2046 = vpop.f32.mrf.mxu0
    %v2047 = vadd.f32 %v1934, %v2046
    %v2048 = vpop.f32.mrf.mxu0
    %v2049 = vadd.f32 %v1936, %v2048
    %v2050 = vpop.f32.mrf.mxu0
    %v2051 = vadd.f32 %v1938, %v2050
    %v2052 = vpop.f32.mrf.mxu0
    %v2053 = vadd.f32 %v1940, %v2052
    %2054 = vmatprep.mubr.bf16.mxu0 %v178
    %2055 = vmatmul.mubr.bf16.gmra.mxu0 %v177
    %v2056 = vpop.f32.mrf.mxu0
    %v2057 = vadd.f32 %v1944, %v2056
    %v2058 = vpop.f32.mrf.mxu0
    %v2059 = vadd.f32 %v1946, %v2058
    %v2060 = vpop.f32.mrf.mxu0
    %v2061 = vadd.f32 %v1948, %v2060
    %v2062 = vpop.f32.mrf.mxu0
    %v2063 = vadd.f32 %v1950, %v2062
    %2064 = vmatprep.mubr.bf16.mxu0 %v185
    %2065 = vmatmul.mubr.bf16.gmra.mxu0 %v184
    %v2066 = vpop.f32.mrf.mxu0
    %v2067 = vadd.f32 %v1954, %v2066
    %v2068 = vpop.f32.mrf.mxu0
    %v2069 = vadd.f32 %v1956, %v2068
    %v2070 = vpop.f32.mrf.mxu0
    %v2071 = vadd.f32 %v1958, %v2070
    %v2072 = vpop.f32.mrf.mxu0
    %v2073 = vadd.f32 %v1960, %v2072
    %2074 = vmatprep.mubr.bf16.mxu0 %v192
    %2075 = vmatmul.mubr.bf16.gmra.mxu0 %v191
    %v2076 = vpop.f32.mrf.mxu0
    %v2077 = vadd.f32 %v1964, %v2076
    %v2078 = vpop.f32.mrf.mxu0
    %v2079 = vadd.f32 %v1966, %v2078
    %v2080 = vpop.f32.mrf.mxu0
    %v2081 = vadd.f32 %v1968, %v2080
    %v2082 = vpop.f32.mrf.mxu0
    %v2083 = vadd.f32 %v1970, %v2082
    %2084 = vmatprep.mubr.bf16.mxu0 %v199
    %2085 = vmatmul.mubr.bf16.gmra.mxu0 %v198
    %v2086 = vpop.f32.mrf.mxu0
    %v2087 = vadd.f32 %v1974, %v2086
    %v2088 = vpop.f32.mrf.mxu0
    %v2089 = vadd.f32 %v1976, %v2088
    %v2090 = vpop.f32.mrf.mxu0
    %v2091 = vadd.f32 %v1978, %v2090
    %v2092 = vpop.f32.mrf.mxu0
    %v2093 = vadd.f32 %v1980, %v2092
    %2094 = vmatprep.mubr.bf16.mxu0 %v206
    %2095 = vmatmul.mubr.bf16.gmra.mxu0 %v205
    %v2096 = vpop.f32.mrf.mxu0
    %v2097 = vadd.f32 %v1984, %v2096
    %v2098 = vpop.f32.mrf.mxu0
    %v2099 = vadd.f32 %v1986, %v2098
    %v2100 = vpop.f32.mrf.mxu0
    %v2101 = vadd.f32 %v1988, %v2100
    %v2102 = vpop.f32.mrf.mxu0
    %v2103 = vadd.f32 %v1990, %v2102
    %2104 = vmatprep.mubr.bf16.mxu0 %v213
    %2105 = vmatmul.mubr.bf16.gmra.mxu0 %v212
    %v2106 = vpop.f32.mrf.mxu0
    %v2107 = vadd.f32 %v1994, %v2106
    %v2108 = vpop.f32.mrf.mxu0
    %v2109 = vadd.f32 %v1996, %v2108
    %v2110 = vpop.f32.mrf.mxu0
    %v2111 = vadd.f32 %v1998, %v2110
    %v2112 = vpop.f32.mrf.mxu0
    %v2113 = vadd.f32 %v2000, %v2112
    %2114 = vmatprep.mubr.bf16.mxu0 %v220
    %2115 = vmatmul.mubr.bf16.gmra.mxu0 %v219
    %v2116 = vpop.f32.mrf.mxu0
    %v2117 = vadd.f32 %v2004, %v2116
    %v2118 = vpop.f32.mrf.mxu0
    %v2119 = vadd.f32 %v2006, %v2118
    %v2120 = vpop.f32.mrf.mxu0
    %v2121 = vadd.f32 %v2008, %v2120
    %v2122 = vpop.f32.mrf.mxu0
    %v2123 = vadd.f32 %v2010, %v2122
    %2124 = vdwg.mxu0
    %2125 = vmatprep.subr.bf16.mxu0 %v1189
    %2126 = vmatpush1.bf16.msra.mxu0 %v1188
    %2127 = vmatprep.subr.bf16.mxu0 %v1185
    %2128 = vmatpush1.bf16.msra.mxu0 %v1184
    %2129 = vmatprep.subr.bf16.mxu0 %v1181
    %2130 = vmatpush1.bf16.msra.mxu0 %v1180
    %2131 = vmatprep.subr.bf16.mxu0 %v1177
    %2132 = vmatpush1.bf16.msra.mxu0 %v1176
    %2133 = vmatprep.subr.bf16.mxu0 %v1173
    %2134 = vmatpush1.bf16.msra.mxu0 %v1172
    %2135 = vmatprep.subr.bf16.mxu0 %v1169
    %2136 = vmatpush1.bf16.msra.mxu0 %v1168
    %2137 = vmatprep.subr.bf16.mxu0 %v1165
    %2138 = vmatpush1.bf16.msra.mxu0 %v1164
    %2139 = vmatprep.subr.bf16.mxu0 %v1161
    %2140 = vmatpush1.bf16.msra.mxu0 %v1160
    %2141 = vmatprep.subr.bf16.mxu0 %v1221
    %2142 = vmatpush2.bf16.msra.mxu0 %v1220
    %2143 = vmatprep.subr.bf16.mxu0 %v1217
    %2144 = vmatpush2.bf16.msra.mxu0 %v1216
    %2145 = vmatprep.subr.bf16.mxu0 %v1213
    %2146 = vmatpush2.bf16.msra.mxu0 %v1212
    %2147 = vmatprep.subr.bf16.mxu0 %v1209
    %2148 = vmatpush2.bf16.msra.mxu0 %v1208
    %2149 = vmatprep.subr.bf16.mxu0 %v1205
    %2150 = vmatpush2.bf16.msra.mxu0 %v1204
    %2151 = vmatprep.subr.bf16.mxu0 %v1201
    %2152 = vmatpush2.bf16.msra.mxu0 %v1200
    %2153 = vmatprep.subr.bf16.mxu0 %v1197
    %2154 = vmatpush2.bf16.msra.mxu0 %v1196
    %2155 = vmatprep.subr.bf16.mxu0 %v1193
    %2156 = vmatpush2.bf16.msra.mxu0 %v1192
    %2157 = vmatprep.mubr.bf16.mxu0 %v173
    %2158 = vmatmul.mubr.bf16.gmra.mxu0 %v172
    %v2159 = vpop.f32.mrf.mxu0
    %v2160 = vadd.f32 %v2047, %v2159
    %v2161 = vpop.f32.mrf.mxu0
    %v2162 = vadd.f32 %v2049, %v2161
    %v2163 = vpop.f32.mrf.mxu0
    %v2164 = vadd.f32 %v2051, %v2163
    %v2165 = vpop.f32.mrf.mxu0
    %v2166 = vadd.f32 %v2053, %v2165
    %2167 = vmatprep.mubr.bf16.mxu0 %v180
    %2168 = vmatmul.mubr.bf16.gmra.mxu0 %v179
    %v2169 = vpop.f32.mrf.mxu0
    %v2170 = vadd.f32 %v2057, %v2169
    %v2171 = vpop.f32.mrf.mxu0
    %v2172 = vadd.f32 %v2059, %v2171
    %v2173 = vpop.f32.mrf.mxu0
    %v2174 = vadd.f32 %v2061, %v2173
    %v2175 = vpop.f32.mrf.mxu0
    %v2176 = vadd.f32 %v2063, %v2175
    %2177 = vmatprep.mubr.bf16.mxu0 %v187
    %2178 = vmatmul.mubr.bf16.gmra.mxu0 %v186
    %v2179 = vpop.f32.mrf.mxu0
    %v2180 = vadd.f32 %v2067, %v2179
    %v2181 = vpop.f32.mrf.mxu0
    %v2182 = vadd.f32 %v2069, %v2181
    %v2183 = vpop.f32.mrf.mxu0
    %v2184 = vadd.f32 %v2071, %v2183
    %v2185 = vpop.f32.mrf.mxu0
    %v2186 = vadd.f32 %v2073, %v2185
    %2187 = vmatprep.mubr.bf16.mxu0 %v194
    %2188 = vmatmul.mubr.bf16.gmra.mxu0 %v193
    %v2189 = vpop.f32.mrf.mxu0
    %v2190 = vadd.f32 %v2077, %v2189
    %v2191 = vpop.f32.mrf.mxu0
    %v2192 = vadd.f32 %v2079, %v2191
    %v2193 = vpop.f32.mrf.mxu0
    %v2194 = vadd.f32 %v2081, %v2193
    %v2195 = vpop.f32.mrf.mxu0
    %v2196 = vadd.f32 %v2083, %v2195
    %2197 = vmatprep.mubr.bf16.mxu0 %v201
    %2198 = vmatmul.mubr.bf16.gmra.mxu0 %v200
    %v2199 = vpop.f32.mrf.mxu0
    %v2200 = vadd.f32 %v2087, %v2199
    %v2201 = vpop.f32.mrf.mxu0
    %v2202 = vadd.f32 %v2089, %v2201
    %v2203 = vpop.f32.mrf.mxu0
    %v2204 = vadd.f32 %v2091, %v2203
    %v2205 = vpop.f32.mrf.mxu0
    %v2206 = vadd.f32 %v2093, %v2205
    %2207 = vmatprep.mubr.bf16.mxu0 %v208
    %2208 = vmatmul.mubr.bf16.gmra.mxu0 %v207
    %v2209 = vpop.f32.mrf.mxu0
    %v2210 = vadd.f32 %v2097, %v2209
    %v2211 = vpop.f32.mrf.mxu0
    %v2212 = vadd.f32 %v2099, %v2211
    %v2213 = vpop.f32.mrf.mxu0
    %v2214 = vadd.f32 %v2101, %v2213
    %v2215 = vpop.f32.mrf.mxu0
    %v2216 = vadd.f32 %v2103, %v2215
    %2217 = vmatprep.mubr.bf16.mxu0 %v215
    %2218 = vmatmul.mubr.bf16.gmra.mxu0 %v214
    %v2219 = vpop.f32.mrf.mxu0
    %v2220 = vadd.f32 %v2107, %v2219
    %v2221 = vpop.f32.mrf.mxu0
    %v2222 = vadd.f32 %v2109, %v2221
    %v2223 = vpop.f32.mrf.mxu0
    %v2224 = vadd.f32 %v2111, %v2223
    %v2225 = vpop.f32.mrf.mxu0
    %v2226 = vadd.f32 %v2113, %v2225
    %2227 = vmatprep.mubr.bf16.mxu0 %v222
    %2228 = vmatmul.mubr.bf16.gmra.mxu0 %v221
    %v2229 = vpop.f32.mrf.mxu0
    %v2230 = vadd.f32 %v2117, %v2229
    %v2231 = vpop.f32.mrf.mxu0
    %v2232 = vadd.f32 %v2119, %v2231
    %v2233 = vpop.f32.mrf.mxu0
    %v2234 = vadd.f32 %v2121, %v2233
    %v2235 = vpop.f32.mrf.mxu0
    %v2236 = vadd.f32 %v2123, %v2235
    %2237 = vdwg.mxu0
    %2238 = vmatprep.subr.bf16.mxu0 0
    %2239 = vmatpush1.bf16.msra.mxu0 0
    %2240 = vmatprep.subr.bf16.mxu0 0
    %2241 = vmatpush1.bf16.msra.mxu0 0
    %2242 = vmatprep.subr.bf16.mxu0 0
    %2243 = vmatpush1.bf16.msra.mxu0 0
    %2244 = vmatprep.subr.bf16.mxu0 0
    %2245 = vmatpush1.bf16.msra.mxu0 0
    %2246 = vmatprep.subr.bf16.mxu0 0
    %2247 = vmatpush1.bf16.msra.mxu0 0
    %2248 = vmatprep.subr.bf16.mxu0 0
    %2249 = vmatpush1.bf16.msra.mxu0 0
    %2250 = vmatprep.subr.bf16.mxu0 0
    %2251 = vmatpush1.bf16.msra.mxu0 0
    %2252 = vmatprep.subr.bf16.mxu0 %v1225
    %2253 = vmatpush1.bf16.msra.mxu0 %v1224
    %2254 = vmatprep.subr.bf16.mxu0 0
    %2255 = vmatpush2.bf16.msra.mxu0 0
    %2256 = vmatprep.subr.bf16.mxu0 0
    %2257 = vmatpush2.bf16.msra.mxu0 0
    %2258 = vmatprep.subr.bf16.mxu0 0
    %2259 = vmatpush2.bf16.msra.mxu0 0
    %2260 = vmatprep.subr.bf16.mxu0 0
    %2261 = vmatpush2.bf16.msra.mxu0 0
    %2262 = vmatprep.subr.bf16.mxu0 0
    %2263 = vmatpush2.bf16.msra.mxu0 0
    %2264 = vmatprep.subr.bf16.mxu0 0
    %2265 = vmatpush2.bf16.msra.mxu0 0
    %2266 = vmatprep.subr.bf16.mxu0 0
    %2267 = vmatpush2.bf16.msra.mxu0 0
    %2268 = vmatprep.subr.bf16.mxu0 0
    %2269 = vmatpush2.bf16.msra.mxu0 0
    %2270 = vmatprep.mubr.bf16.mxu0 0
    %2271 = vmatmul.mubr.bf16.gmra.mxu0 %v1424
    %v2272 = vpop.f32.mrf.mxu0
    %v2273 = vadd.f32 %v2160, %v2272
    %v2274 = vpop.f32.mrf.mxu0
    %v2275 = vadd.f32 %v2162, %v2274
    %v2276 = vpop.f32.mrf.mxu0
    %v2277 = vadd.f32 %v2164, %v2276
    %v2278 = vpop.f32.mrf.mxu0
    %v2279 = vadd.f32 %v2166, %v2278
    %2280 = vmatprep.mubr.bf16.mxu0 0
    %2281 = vmatmul.mubr.bf16.gmra.mxu0 %v1427
    %v2282 = vpop.f32.mrf.mxu0
    %v2283 = vadd.f32 %v2170, %v2282
    %v2284 = vpop.f32.mrf.mxu0
    %v2285 = vadd.f32 %v2172, %v2284
    %v2286 = vpop.f32.mrf.mxu0
    %v2287 = vadd.f32 %v2174, %v2286
    %v2288 = vpop.f32.mrf.mxu0
    %v2289 = vadd.f32 %v2176, %v2288
    %2290 = vmatprep.mubr.bf16.mxu0 0
    %2291 = vmatmul.mubr.bf16.gmra.mxu0 %v1430
    %v2292 = vpop.f32.mrf.mxu0
    %v2293 = vadd.f32 %v2180, %v2292
    %v2294 = vpop.f32.mrf.mxu0
    %v2295 = vadd.f32 %v2182, %v2294
    %v2296 = vpop.f32.mrf.mxu0
    %v2297 = vadd.f32 %v2184, %v2296
    %v2298 = vpop.f32.mrf.mxu0
    %v2299 = vadd.f32 %v2186, %v2298
    %2300 = vmatprep.mubr.bf16.mxu0 0
    %2301 = vmatmul.mubr.bf16.gmra.mxu0 %v1433
    %v2302 = vpop.f32.mrf.mxu0
    %v2303 = vadd.f32 %v2190, %v2302
    %v2304 = vpop.f32.mrf.mxu0
    %v2305 = vadd.f32 %v2192, %v2304
    %v2306 = vpop.f32.mrf.mxu0
    %v2307 = vadd.f32 %v2194, %v2306
    %v2308 = vpop.f32.mrf.mxu0
    %v2309 = vadd.f32 %v2196, %v2308
    %2310 = vmatprep.mubr.bf16.mxu0 0
    %2311 = vmatmul.mubr.bf16.gmra.mxu0 %v1436
    %v2312 = vpop.f32.mrf.mxu0
    %v2313 = vadd.f32 %v2200, %v2312
    %v2314 = vpop.f32.mrf.mxu0
    %v2315 = vadd.f32 %v2202, %v2314
    %v2316 = vpop.f32.mrf.mxu0
    %v2317 = vadd.f32 %v2204, %v2316
    %v2318 = vpop.f32.mrf.mxu0
    %v2319 = vadd.f32 %v2206, %v2318
    %2320 = vmatprep.mubr.bf16.mxu0 0
    %2321 = vmatmul.mubr.bf16.gmra.mxu0 %v1439
    %v2322 = vpop.f32.mrf.mxu0
    %v2323 = vadd.f32 %v2210, %v2322
    %v2324 = vpop.f32.mrf.mxu0
    %v2325 = vadd.f32 %v2212, %v2324
    %v2326 = vpop.f32.mrf.mxu0
    %v2327 = vadd.f32 %v2214, %v2326
    %v2328 = vpop.f32.mrf.mxu0
    %v2329 = vadd.f32 %v2216, %v2328
    %2330 = vmatprep.mubr.bf16.mxu0 0
    %2331 = vmatmul.mubr.bf16.gmra.mxu0 %v1442
    %v2332 = vpop.f32.mrf.mxu0
    %v2333 = vadd.f32 %v2220, %v2332
    %v2334 = vpop.f32.mrf.mxu0
    %v2335 = vadd.f32 %v2222, %v2334
    %v2336 = vpop.f32.mrf.mxu0
    %v2337 = vadd.f32 %v2224, %v2336
    %v2338 = vpop.f32.mrf.mxu0
    %v2339 = vadd.f32 %v2226, %v2338
    %2340 = vmatprep.mubr.bf16.mxu0 0
    %2341 = vmatmul.mubr.bf16.gmra.mxu0 %v1445
    %v2342 = vpop.f32.mrf.mxu0
    %v2343 = vadd.f32 %v2230, %v2342
    %v2344 = vpop.f32.mrf.mxu0
    %v2345 = vadd.f32 %v2232, %v2344
    %v2346 = vpop.f32.mrf.mxu0
    %v2347 = vadd.f32 %v2234, %v2346
    %v2348 = vpop.f32.mrf.mxu0
    %v2349 = vadd.f32 %v2236, %v2348
    %2350 = vdwg.mxu0
    %v2351 = vpack.c.bf16 %v1825, %v1821
    %v2352 = vpack.c.bf16 %v1827, %v1823
    %v2353 = vpack.c.bf16 %v2277, %v2273
    %v2354 = vpack.c.bf16 %v2279, %v2275
    %v2355 = vpack.c.bf16 %v1835, %v1831
    %v2356 = vpack.c.bf16 %v1837, %v1833
    %v2357 = vpack.c.bf16 %v2287, %v2283
    %v2358 = vpack.c.bf16 %v2289, %v2285
    %v2359 = vpack.c.bf16 %v1845, %v1841
    %v2360 = vpack.c.bf16 %v1847, %v1843
    %v2361 = vpack.c.bf16 %v2297, %v2293
    %v2362 = vpack.c.bf16 %v2299, %v2295
    %v2363 = vpack.c.bf16 %v1855, %v1851
    %v2364 = vpack.c.bf16 %v1857, %v1853
    %v2365 = vpack.c.bf16 %v2307, %v2303
    %v2366 = vpack.c.bf16 %v2309, %v2305
    %v2367 = vpack.c.bf16 %v1865, %v1861
    %v2368 = vpack.c.bf16 %v1867, %v1863
    %v2369 = vpack.c.bf16 %v2317, %v2313
    %v2370 = vpack.c.bf16 %v2319, %v2315
    %v2371 = vpack.c.bf16 %v1875, %v1871
    %v2372 = vpack.c.bf16 %v1877, %v1873
    %v2373 = vpack.c.bf16 %v2327, %v2323
    %v2374 = vpack.c.bf16 %v2329, %v2325
    %v2375 = vpack.c.bf16 %v1885, %v1881
    %v2376 = vpack.c.bf16 %v1887, %v1883
    %v2377 = vpack.c.bf16 %v2337, %v2333
    %v2378 = vpack.c.bf16 %v2339, %v2335
    %v2379 = vpack.c.bf16 %v1895, %v1891
    %v2380 = vpack.c.bf16 %v1897, %v1893
    %v2381 = vpack.c.bf16 %v2347, %v2343
    %v2382 = vpack.c.bf16 %v2349, %v2345
    %v2383 = vmax.bf16 %v2351, 0
    %v2384 = vmax.bf16 %v2352, 0
    %v2385 = vmax.bf16 %v2353, 0
    %v2386 = vmax.bf16 %v2354, 0
    %v2387 = vmax.bf16 %v2355, 0
    %v2388 = vmax.bf16 %v2356, 0
    %v2389 = vmax.bf16 %v2357, 0
    %v2390 = vmax.bf16 %v2358, 0
    %v2391 = vmax.bf16 %v2359, 0
    %v2392 = vmax.bf16 %v2360, 0
    %v2393 = vmax.bf16 %v2361, 0
    %v2394 = vmax.bf16 %v2362, 0
    %v2395 = vmax.bf16 %v2363, 0
    %v2396 = vmax.bf16 %v2364, 0
    %v2397 = vmax.bf16 %v2365, 0
    %v2398 = vmax.bf16 %v2366, 0
    %v2399 = vmax.bf16 %v2367, 0
    %v2400 = vmax.bf16 %v2368, 0
    %v2401 = vmax.bf16 %v2369, 0
    %v2402 = vmax.bf16 %v2370, 0
    %v2403 = vmax.bf16 %v2371, 0
    %v2404 = vmax.bf16 %v2372, 0
    %v2405 = vmax.bf16 %v2373, 0
    %v2406 = vmax.bf16 %v2374, 0
    %v2407 = vmax.bf16 %v2375, 0
    %v2408 = vmax.bf16 %v2376, 0
    %v2409 = vmax.bf16 %v2377, 0
    %v2410 = vmax.bf16 %v2378, 0
    %v2411 = vmax.bf16 %v2379, 0
    %v2412 = vmax.bf16 %v2380, 0
    %v2413 = vmax.bf16 %v2381, 0
    %v2414 = vmax.bf16 %v2382, 0
    %v2415 = vld [vmem:[#allocation2] sm:$0xff]
    %v2416 = vld [vmem:[#allocation2 + $0x8] sm:$0xff]
    %v2417 = vld [vmem:[#allocation2 + $0x10] sm:$0xff]
    %v2418 = vld [vmem:[#allocation2 + $0x18] sm:$0xff]
    %v2419 = vld [vmem:[#allocation2 + $0x20] sm:$0xff]
    %v2420 = vld [vmem:[#allocation2 + $0x28] sm:$0xff]
    %v2421 = vld [vmem:[#allocation2 + $0x30] sm:$0xff]
    %v2422 = vld [vmem:[#allocation2 + $0x38] sm:$0xff]
    %v2423 = vld [vmem:[#allocation2 + $0x40] sm:$0xff]
    %v2424 = vld [vmem:[#allocation2 + $0x48] sm:$0xff]
    %v2425 = vld [vmem:[#allocation2 + $0x50] sm:$0xff]
    %v2426 = vld [vmem:[#allocation2 + $0x58] sm:$0xff]
    %v2427 = vld [vmem:[#allocation2 + $0x60] sm:$0xff]
    %v2428 = vld [vmem:[#allocation2 + $0x68] sm:$0xff]
    %v2429 = vld [vmem:[#allocation2 + $0x70] sm:$0xff]
    %v2430 = vld [vmem:[#allocation2 + $0x78] sm:$0xff]
    %v2431 = vld [vmem:[#allocation2 + $0x80] sm:$0xff]
    %v2432 = vld [vmem:[#allocation2 + $0x88] sm:$0xff]
    %v2433 = vld [vmem:[#allocation2 + $0x90] sm:$0xff]
    %v2434 = vld [vmem:[#allocation2 + $0x98] sm:$0xff]
    %v2435 = vld [vmem:[#allocation2 + $0xa0] sm:$0xff]
    %v2436 = vld [vmem:[#allocation2 + $0xa8] sm:$0xff]
    %v2437 = vld [vmem:[#allocation2 + $0xb0] sm:$0xff]
    %v2438 = vld [vmem:[#allocation2 + $0xb8] sm:$0xff]
    %v2439 = vld [vmem:[#allocation2 + $0xc0] sm:$0xff]
    %v2440 = vld [vmem:[#allocation2 + $0xc8] sm:$0xff]
    %v2441 = vld [vmem:[#allocation2 + $0xd0] sm:$0xff]
    %v2442 = vld [vmem:[#allocation2 + $0xd8] sm:$0xff]
    %v2443 = vld [vmem:[#allocation2 + $0xe0] sm:$0xff]
    %v2444 = vld [vmem:[#allocation2 + $0xe8] sm:$0xff]
    %v2445 = vld [vmem:[#allocation2 + $0xf0] sm:$0xff]
    %v2446 = vld [vmem:[#allocation2 + $0xf8] sm:$0xff]
    %v2447 = vld [vmem:[#allocation2 + $0x100] sm:$0xff]
    %v2448 = vld [vmem:[#allocation2 + $0x108] sm:$0xff]
    %v2449 = vld [vmem:[#allocation2 + $0x110] sm:$0xff]
    %v2450 = vld [vmem:[#allocation2 + $0x118] sm:$0xff]
    %v2451 = vld [vmem:[#allocation2 + $0x120] sm:$0xff]
    %v2452 = vld [vmem:[#allocation2 + $0x128] sm:$0xff]
    %v2453 = vld [vmem:[#allocation2 + $0x130] sm:$0xff]
    %v2454 = vld [vmem:[#allocation2 + $0x138] sm:$0xff]
    %v2455 = vld [vmem:[#allocation2 + $0x140] sm:$0xff]
    %v2456 = vld [vmem:[#allocation2 + $0x148] sm:$0xff]
    %v2457 = vld [vmem:[#allocation2 + $0x150] sm:$0xff]
    %v2458 = vld [vmem:[#allocation2 + $0x158] sm:$0xff]
    %v2459 = vld [vmem:[#allocation2 + $0x160] sm:$0xff]
    %v2460 = vld [vmem:[#allocation2 + $0x168] sm:$0xff]
    %v2461 = vld [vmem:[#allocation2 + $0x170] sm:$0xff]
    %v2462 = vld [vmem:[#allocation2 + $0x178] sm:$0xff]
    %v2463 = vld [vmem:[#allocation2 + $0x180] sm:$0xff]
    %v2464 = vld [vmem:[#allocation2 + $0x188] sm:$0xff]
    %v2465 = vld [vmem:[#allocation2 + $0x190] sm:$0xff]
    %v2466 = vld [vmem:[#allocation2 + $0x198] sm:$0xff]
    %v2467 = vld [vmem:[#allocation2 + $0x1a0] sm:$0xff]
    %v2468 = vld [vmem:[#allocation2 + $0x1a8] sm:$0xff]
    %v2469 = vld [vmem:[#allocation2 + $0x1b0] sm:$0xff]
    %v2470 = vld [vmem:[#allocation2 + $0x1b8] sm:$0xff]
    %v2471 = vld [vmem:[#allocation2 + $0x1c0] sm:$0xff]
    %v2472 = vld [vmem:[#allocation2 + $0x1c8] sm:$0xff]
    %v2473 = vld [vmem:[#allocation2 + $0x1d0] sm:$0xff]
    %v2474 = vld [vmem:[#allocation2 + $0x1d8] sm:$0xff]
    %v2475 = vld [vmem:[#allocation2 + $0x1e0] sm:$0xff]
    %v2476 = vld [vmem:[#allocation2 + $0x1e8] sm:$0xff]
    %v2477 = vld [vmem:[#allocation2 + $0x1f0] sm:$0xff]
    %v2478 = vld [vmem:[#allocation2 + $0x1f8] sm:$0xff]
    %v2479 = vld [vmem:[%s4] sm:$0x3]
    %v2481 = vlaneseq
    %v2482 = vshrl.u32 %v2481, 7
    %v2483 = vsub.s32 0, %v2482
    %v2484 = vrot.slane %v2479, %v2483
    %v2485 = vlaneseq
    %v2486 = vshrl.u32 %v2485, 7
    %v2487 = vsub.s32 1, %v2486
    %v2488 = vrot.slane %v2479, %v2487
    %v2555 = vunpack.c.l.b16 %v2415
    %v2556 = vunpack.c.h.b16 %v2415
    %v2557 = vunpack.c.l.b16 %v2416
    %v2558 = vunpack.c.h.b16 %v2416
    %v2559 = vunpack.c.l.b16 %v2417
    %v2560 = vunpack.c.h.b16 %v2417
    %v2561 = vunpack.c.l.b16 %v2418
    %v2562 = vunpack.c.h.b16 %v2418
    %v2563 = vunpack.c.l.b16 %v2419
    %v2564 = vunpack.c.h.b16 %v2419
    %v2565 = vunpack.c.l.b16 %v2420
    %v2566 = vunpack.c.h.b16 %v2420
    %v2567 = vunpack.c.l.b16 %v2421
    %v2568 = vunpack.c.h.b16 %v2421
    %v2569 = vunpack.c.l.b16 %v2422
    %v2570 = vunpack.c.h.b16 %v2422
    %v2571 = vunpack.c.l.b16 %v2423
    %v2572 = vunpack.c.h.b16 %v2423
    %v2573 = vunpack.c.l.b16 %v2424
    %v2574 = vunpack.c.h.b16 %v2424
    %v2575 = vunpack.c.l.b16 %v2425
    %v2576 = vunpack.c.h.b16 %v2425
    %v2577 = vunpack.c.l.b16 %v2426
    %v2578 = vunpack.c.h.b16 %v2426
    %v2579 = vunpack.c.l.b16 %v2427
    %v2580 = vunpack.c.h.b16 %v2427
    %v2581 = vunpack.c.l.b16 %v2428
    %v2582 = vunpack.c.h.b16 %v2428
    %v2583 = vunpack.c.l.b16 %v2429
    %v2584 = vunpack.c.h.b16 %v2429
    %v2585 = vunpack.c.l.b16 %v2430
    %v2586 = vunpack.c.h.b16 %v2430
    %v2587 = vunpack.c.l.b16 %v2431
    %v2588 = vunpack.c.h.b16 %v2431
    %v2589 = vunpack.c.l.b16 %v2432
    %v2590 = vunpack.c.h.b16 %v2432
    %v2591 = vunpack.c.l.b16 %v2433
    %v2592 = vunpack.c.h.b16 %v2433
    %v2593 = vunpack.c.l.b16 %v2434
    %v2594 = vunpack.c.h.b16 %v2434
    %v2595 = vunpack.c.l.b16 %v2435
    %v2596 = vunpack.c.h.b16 %v2435
    %v2597 = vunpack.c.l.b16 %v2436
    %v2598 = vunpack.c.h.b16 %v2436
    %v2599 = vunpack.c.l.b16 %v2437
    %v2600 = vunpack.c.h.b16 %v2437
    %v2601 = vunpack.c.l.b16 %v2438
    %v2602 = vunpack.c.h.b16 %v2438
    %v2603 = vunpack.c.l.b16 %v2439
    %v2604 = vunpack.c.h.b16 %v2439
    %v2605 = vunpack.c.l.b16 %v2440
    %v2606 = vunpack.c.h.b16 %v2440
    %v2607 = vunpack.c.l.b16 %v2441
    %v2608 = vunpack.c.h.b16 %v2441
    %v2609 = vunpack.c.l.b16 %v2442
    %v2610 = vunpack.c.h.b16 %v2442
    %v2611 = vunpack.c.l.b16 %v2443
    %v2612 = vunpack.c.h.b16 %v2443
    %v2613 = vunpack.c.l.b16 %v2444
    %v2614 = vunpack.c.h.b16 %v2444
    %v2615 = vunpack.c.l.b16 %v2445
    %v2616 = vunpack.c.h.b16 %v2445
    %v2617 = vunpack.c.l.b16 %v2446
    %v2618 = vunpack.c.h.b16 %v2446
    %v2619 = vunpack.c.l.b16 %v2447
    %v2620 = vunpack.c.h.b16 %v2447
    %v2621 = vunpack.c.l.b16 %v2448
    %v2622 = vunpack.c.h.b16 %v2448
    %v2623 = vunpack.c.l.b16 %v2449
    %v2624 = vunpack.c.h.b16 %v2449
    %v2625 = vunpack.c.l.b16 %v2450
    %v2626 = vunpack.c.h.b16 %v2450
    %v2627 = vunpack.c.l.b16 %v2451
    %v2628 = vunpack.c.h.b16 %v2451
    %v2629 = vunpack.c.l.b16 %v2452
    %v2630 = vunpack.c.h.b16 %v2452
    %v2631 = vunpack.c.l.b16 %v2453
    %v2632 = vunpack.c.h.b16 %v2453
    %v2633 = vunpack.c.l.b16 %v2454
    %v2634 = vunpack.c.h.b16 %v2454
    %v2635 = vunpack.c.l.b16 %v2455
    %v2636 = vunpack.c.h.b16 %v2455
    %v2637 = vunpack.c.l.b16 %v2456
    %v2638 = vunpack.c.h.b16 %v2456
    %v2639 = vunpack.c.l.b16 %v2457
    %v2640 = vunpack.c.h.b16 %v2457
    %v2641 = vunpack.c.l.b16 %v2458
    %v2642 = vunpack.c.h.b16 %v2458
    %v2643 = vunpack.c.l.b16 %v2459
    %v2644 = vunpack.c.h.b16 %v2459
    %v2645 = vunpack.c.l.b16 %v2460
    %v2646 = vunpack.c.h.b16 %v2460
    %v2647 = vunpack.c.l.b16 %v2461
    %v2648 = vunpack.c.h.b16 %v2461
    %v2649 = vunpack.c.l.b16 %v2462
    %v2650 = vunpack.c.h.b16 %v2462
    %v2651 = vunpack.c.l.b16 %v2463
    %v2652 = vunpack.c.h.b16 %v2463
    %v2653 = vunpack.c.l.b16 %v2464
    %v2654 = vunpack.c.h.b16 %v2464
    %v2655 = vunpack.c.l.b16 %v2465
    %v2656 = vunpack.c.h.b16 %v2465
    %v2657 = vunpack.c.l.b16 %v2466
    %v2658 = vunpack.c.h.b16 %v2466
    %v2659 = vunpack.c.l.b16 %v2467
    %v2660 = vunpack.c.h.b16 %v2467
    %v2661 = vunpack.c.l.b16 %v2468
    %v2662 = vunpack.c.h.b16 %v2468
    %v2663 = vunpack.c.l.b16 %v2469
    %v2664 = vunpack.c.h.b16 %v2469
    %v2665 = vunpack.c.l.b16 %v2470
    %v2666 = vunpack.c.h.b16 %v2470
    %v2667 = vunpack.c.l.b16 %v2471
    %v2668 = vunpack.c.h.b16 %v2471
    %v2669 = vunpack.c.l.b16 %v2472
    %v2670 = vunpack.c.h.b16 %v2472
    %v2671 = vunpack.c.l.b16 %v2473
    %v2672 = vunpack.c.h.b16 %v2473
    %v2673 = vunpack.c.l.b16 %v2474
    %v2674 = vunpack.c.h.b16 %v2474
    %v2675 = vunpack.c.l.b16 %v2475
    %v2676 = vunpack.c.h.b16 %v2475
    %v2677 = vunpack.c.l.b16 %v2476
    %v2678 = vunpack.c.h.b16 %v2476
    %v2679 = vunpack.c.l.b16 %v2477
    %v2680 = vunpack.c.h.b16 %v2477
    %v2681 = vunpack.c.l.b16 %v2478
    %v2682 = vunpack.c.h.b16 %v2478
    %v2683 = vpack.c.b16 %v2557, %v2555
    %v2684 = vpack.c.b16 %v2558, %v2556
    %v2685 = vpack.c.b16 %v2561, %v2559
    %v2686 = vpack.c.b16 %v2562, %v2560
    %v2687 = vpack.c.b16 %v2565, %v2563
    %v2688 = vpack.c.b16 %v2566, %v2564
    %v2689 = vpack.c.b16 %v2569, %v2567
    %v2690 = vpack.c.b16 %v2570, %v2568
    %v2691 = vpack.c.b16 %v2573, %v2571
    %v2692 = vpack.c.b16 %v2574, %v2572
    %v2693 = vpack.c.b16 %v2577, %v2575
    %v2694 = vpack.c.b16 %v2578, %v2576
    %v2695 = vpack.c.b16 %v2581, %v2579
    %v2696 = vpack.c.b16 %v2582, %v2580
    %v2697 = vpack.c.b16 %v2585, %v2583
    %v2698 = vpack.c.b16 %v2586, %v2584
    %v2699 = vpack.c.b16 %v2589, %v2587
    %v2700 = vpack.c.b16 %v2590, %v2588
    %v2701 = vpack.c.b16 %v2593, %v2591
    %v2702 = vpack.c.b16 %v2594, %v2592
    %v2703 = vpack.c.b16 %v2597, %v2595
    %v2704 = vpack.c.b16 %v2598, %v2596
    %v2705 = vpack.c.b16 %v2601, %v2599
    %v2706 = vpack.c.b16 %v2602, %v2600
    %v2707 = vpack.c.b16 %v2605, %v2603
    %v2708 = vpack.c.b16 %v2606, %v2604
    %v2709 = vpack.c.b16 %v2609, %v2607
    %v2710 = vpack.c.b16 %v2610, %v2608
    %v2711 = vpack.c.b16 %v2613, %v2611
    %v2712 = vpack.c.b16 %v2614, %v2612
    %v2713 = vpack.c.b16 %v2617, %v2615
    %v2714 = vpack.c.b16 %v2618, %v2616
    %v2715 = vpack.c.b16 %v2621, %v2619
    %v2716 = vpack.c.b16 %v2622, %v2620
    %v2717 = vpack.c.b16 %v2625, %v2623
    %v2718 = vpack.c.b16 %v2626, %v2624
    %v2719 = vpack.c.b16 %v2629, %v2627
    %v2720 = vpack.c.b16 %v2630, %v2628
    %v2721 = vpack.c.b16 %v2633, %v2631
    %v2722 = vpack.c.b16 %v2634, %v2632
    %v2723 = vpack.c.b16 %v2637, %v2635
    %v2724 = vpack.c.b16 %v2638, %v2636
    %v2725 = vpack.c.b16 %v2641, %v2639
    %v2726 = vpack.c.b16 %v2642, %v2640
    %v2727 = vpack.c.b16 %v2645, %v2643
    %v2728 = vpack.c.b16 %v2646, %v2644
    %v2729 = vpack.c.b16 %v2649, %v2647
    %v2730 = vpack.c.b16 %v2650, %v2648
    %v2731 = vpack.c.b16 %v2653, %v2651
    %v2732 = vpack.c.b16 %v2654, %v2652
    %v2733 = vpack.c.b16 %v2657, %v2655
    %v2734 = vpack.c.b16 %v2658, %v2656
    %v2735 = vpack.c.b16 %v2661, %v2659
    %v2736 = vpack.c.b16 %v2662, %v2660
    %v2737 = vpack.c.b16 %v2665, %v2663
    %v2738 = vpack.c.b16 %v2666, %v2664
    %v2739 = vpack.c.b16 %v2669, %v2667
    %v2740 = vpack.c.b16 %v2670, %v2668
    %v2741 = vpack.c.b16 %v2673, %v2671
    %v2742 = vpack.c.b16 %v2674, %v2672
    %v2743 = vpack.c.b16 %v2677, %v2675
    %v2744 = vpack.c.b16 %v2678, %v2676
    %v2745 = vpack.c.b16 %v2681, %v2679
    %v2746 = vpack.c.b16 %v2682, %v2680
    %2811 = vmatprep.subr.bf16.mxu0 %v2698
    %2812 = vmatpush1.bf16.msra.mxu0 %v2697
    %2813 = vmatprep.subr.bf16.mxu0 %v2696
    %2814 = vmatpush1.bf16.msra.mxu0 %v2695
    %2815 = vmatprep.subr.bf16.mxu0 %v2694
    %2816 = vmatpush1.bf16.msra.mxu0 %v2693
    %2817 = vmatprep.subr.bf16.mxu0 %v2692
    %2818 = vmatpush1.bf16.msra.mxu0 %v2691
    %2819 = vmatprep.subr.bf16.mxu0 %v2690
    %2820 = vmatpush1.bf16.msra.mxu0 %v2689
    %2821 = vmatprep.subr.bf16.mxu0 %v2688
    %2822 = vmatpush1.bf16.msra.mxu0 %v2687
    %2823 = vmatprep.subr.bf16.mxu0 %v2686
    %2824 = vmatpush1.bf16.msra.mxu0 %v2685
    %2825 = vmatprep.subr.bf16.mxu0 %v2684
    %2826 = vmatpush1.bf16.msra.mxu0 %v2683
    %2827 = vmatprep.subr.bf16.mxu0 %v2714
    %2828 = vmatpush2.bf16.msra.mxu0 %v2713
    %2829 = vmatprep.subr.bf16.mxu0 %v2712
    %2830 = vmatpush2.bf16.msra.mxu0 %v2711
    %2831 = vmatprep.subr.bf16.mxu0 %v2710
    %2832 = vmatpush2.bf16.msra.mxu0 %v2709
    %2833 = vmatprep.subr.bf16.mxu0 %v2708
    %2834 = vmatpush2.bf16.msra.mxu0 %v2707
    %2835 = vmatprep.subr.bf16.mxu0 %v2706
    %2836 = vmatpush2.bf16.msra.mxu0 %v2705
    %2837 = vmatprep.subr.bf16.mxu0 %v2704
    %2838 = vmatpush2.bf16.msra.mxu0 %v2703
    %2839 = vmatprep.subr.bf16.mxu0 %v2702
    %2840 = vmatpush2.bf16.msra.mxu0 %v2701
    %2841 = vmatprep.subr.bf16.mxu0 %v2700
    %2842 = vmatpush2.bf16.msra.mxu0 %v2699
    %2843 = vmatprep.mubr.bf16.mxu0 %v2384
    %2844 = vmatmul.mubr.bf16.gmra.mxu0 %v2383
    %v2845 = vpop.f32.mrf.mxu0
    %v2846 = vadd.f32 %v2484, %v2845
    %v2847 = vpop.f32.mrf.mxu0
    %v2848 = vadd.f32 %v2488, %v2847
    %v2849 = vpop.f32.mrf.mxu0
    %v2850 = vadd.f32 %v2484, %v2849
    %v2851 = vpop.f32.mrf.mxu0
    %v2852 = vadd.f32 %v2488, %v2851
    %2853 = vmatprep.mubr.bf16.mxu0 %v2388
    %2854 = vmatmul.mubr.bf16.gmra.mxu0 %v2387
    %v2855 = vpop.f32.mrf.mxu0
    %v2856 = vadd.f32 %v2484, %v2855
    %v2857 = vpop.f32.mrf.mxu0
    %v2858 = vadd.f32 %v2488, %v2857
    %v2859 = vpop.f32.mrf.mxu0
    %v2860 = vadd.f32 %v2484, %v2859
    %v2861 = vpop.f32.mrf.mxu0
    %v2862 = vadd.f32 %v2488, %v2861
    %2863 = vmatprep.mubr.bf16.mxu0 %v2392
    %2864 = vmatmul.mubr.bf16.gmra.mxu0 %v2391
    %v2865 = vpop.f32.mrf.mxu0
    %v2866 = vadd.f32 %v2484, %v2865
    %v2867 = vpop.f32.mrf.mxu0
    %v2868 = vadd.f32 %v2488, %v2867
    %v2869 = vpop.f32.mrf.mxu0
    %v2870 = vadd.f32 %v2484, %v2869
    %v2871 = vpop.f32.mrf.mxu0
    %v2872 = vadd.f32 %v2488, %v2871
    %2873 = vmatprep.mubr.bf16.mxu0 %v2396
    %2874 = vmatmul.mubr.bf16.gmra.mxu0 %v2395
    %v2875 = vpop.f32.mrf.mxu0
    %v2876 = vadd.f32 %v2484, %v2875
    %v2877 = vpop.f32.mrf.mxu0
    %v2878 = vadd.f32 %v2488, %v2877
    %v2879 = vpop.f32.mrf.mxu0
    %v2880 = vadd.f32 %v2484, %v2879
    %v2881 = vpop.f32.mrf.mxu0
    %v2882 = vadd.f32 %v2488, %v2881
    %2883 = vmatprep.mubr.bf16.mxu0 %v2400
    %2884 = vmatmul.mubr.bf16.gmra.mxu0 %v2399
    %v2885 = vpop.f32.mrf.mxu0
    %v2886 = vadd.f32 %v2484, %v2885
    %v2887 = vpop.f32.mrf.mxu0
    %v2888 = vadd.f32 %v2488, %v2887
    %v2889 = vpop.f32.mrf.mxu0
    %v2890 = vadd.f32 %v2484, %v2889
    %v2891 = vpop.f32.mrf.mxu0
    %v2892 = vadd.f32 %v2488, %v2891
    %2893 = vmatprep.mubr.bf16.mxu0 %v2404
    %2894 = vmatmul.mubr.bf16.gmra.mxu0 %v2403
    %v2895 = vpop.f32.mrf.mxu0
    %v2896 = vadd.f32 %v2484, %v2895
    %v2897 = vpop.f32.mrf.mxu0
    %v2898 = vadd.f32 %v2488, %v2897
    %v2899 = vpop.f32.mrf.mxu0
    %v2900 = vadd.f32 %v2484, %v2899
    %v2901 = vpop.f32.mrf.mxu0
    %v2902 = vadd.f32 %v2488, %v2901
    %2903 = vmatprep.mubr.bf16.mxu0 %v2408
    %2904 = vmatmul.mubr.bf16.gmra.mxu0 %v2407
    %v2905 = vpop.f32.mrf.mxu0
    %v2906 = vadd.f32 %v2484, %v2905
    %v2907 = vpop.f32.mrf.mxu0
    %v2908 = vadd.f32 %v2488, %v2907
    %v2909 = vpop.f32.mrf.mxu0
    %v2910 = vadd.f32 %v2484, %v2909
    %v2911 = vpop.f32.mrf.mxu0
    %v2912 = vadd.f32 %v2488, %v2911
    %2913 = vmatprep.mubr.bf16.mxu0 %v2412
    %2914 = vmatmul.mubr.bf16.gmra.mxu0 %v2411
    %v2915 = vpop.f32.mrf.mxu0
    %v2916 = vadd.f32 %v2484, %v2915
    %v2917 = vpop.f32.mrf.mxu0
    %v2918 = vadd.f32 %v2488, %v2917
    %v2919 = vpop.f32.mrf.mxu0
    %v2920 = vadd.f32 %v2484, %v2919
    %v2921 = vpop.f32.mrf.mxu0
    %v2922 = vadd.f32 %v2488, %v2921
    %2923 = vdwg.mxu0
    %2924 = vmatprep.subr.bf16.mxu0 %v2730
    %2925 = vmatpush1.bf16.msra.mxu0 %v2729
    %2926 = vmatprep.subr.bf16.mxu0 %v2728
    %2927 = vmatpush1.bf16.msra.mxu0 %v2727
    %2928 = vmatprep.subr.bf16.mxu0 %v2726
    %2929 = vmatpush1.bf16.msra.mxu0 %v2725
    %2930 = vmatprep.subr.bf16.mxu0 %v2724
    %2931 = vmatpush1.bf16.msra.mxu0 %v2723
    %2932 = vmatprep.subr.bf16.mxu0 %v2722
    %2933 = vmatpush1.bf16.msra.mxu0 %v2721
    %2934 = vmatprep.subr.bf16.mxu0 %v2720
    %2935 = vmatpush1.bf16.msra.mxu0 %v2719
    %2936 = vmatprep.subr.bf16.mxu0 %v2718
    %2937 = vmatpush1.bf16.msra.mxu0 %v2717
    %2938 = vmatprep.subr.bf16.mxu0 %v2716
    %2939 = vmatpush1.bf16.msra.mxu0 %v2715
    %2940 = vmatprep.subr.bf16.mxu0 %v2746
    %2941 = vmatpush2.bf16.msra.mxu0 %v2745
    %2942 = vmatprep.subr.bf16.mxu0 %v2744
    %2943 = vmatpush2.bf16.msra.mxu0 %v2743
    %2944 = vmatprep.subr.bf16.mxu0 %v2742
    %2945 = vmatpush2.bf16.msra.mxu0 %v2741
    %2946 = vmatprep.subr.bf16.mxu0 %v2740
    %2947 = vmatpush2.bf16.msra.mxu0 %v2739
    %2948 = vmatprep.subr.bf16.mxu0 %v2738
    %2949 = vmatpush2.bf16.msra.mxu0 %v2737
    %2950 = vmatprep.subr.bf16.mxu0 %v2736
    %2951 = vmatpush2.bf16.msra.mxu0 %v2735
    %2952 = vmatprep.subr.bf16.mxu0 %v2734
    %2953 = vmatpush2.bf16.msra.mxu0 %v2733
    %2954 = vmatprep.subr.bf16.mxu0 %v2732
    %2955 = vmatpush2.bf16.msra.mxu0 %v2731
    %2956 = vmatprep.mubr.bf16.mxu0 %v2386
    %2957 = vmatmul.mubr.bf16.gmra.mxu0 %v2385
    %v2958 = vpop.f32.mrf.mxu0
    %v2959 = vadd.f32 %v2846, %v2958
    %v2960 = vpop.f32.mrf.mxu0
    %v2961 = vadd.f32 %v2848, %v2960
    %v2962 = vpop.f32.mrf.mxu0
    %v2963 = vadd.f32 %v2850, %v2962
    %v2964 = vpop.f32.mrf.mxu0
    %v2965 = vadd.f32 %v2852, %v2964
    %2966 = vmatprep.mubr.bf16.mxu0 %v2390
    %2967 = vmatmul.mubr.bf16.gmra.mxu0 %v2389
    %v2968 = vpop.f32.mrf.mxu0
    %v2969 = vadd.f32 %v2856, %v2968
    %v2970 = vpop.f32.mrf.mxu0
    %v2971 = vadd.f32 %v2858, %v2970
    %v2972 = vpop.f32.mrf.mxu0
    %v2973 = vadd.f32 %v2860, %v2972
    %v2974 = vpop.f32.mrf.mxu0
    %v2975 = vadd.f32 %v2862, %v2974
    %2976 = vmatprep.mubr.bf16.mxu0 %v2394
    %2977 = vmatmul.mubr.bf16.gmra.mxu0 %v2393
    %v2978 = vpop.f32.mrf.mxu0
    %v2979 = vadd.f32 %v2866, %v2978
    %v2980 = vpop.f32.mrf.mxu0
    %v2981 = vadd.f32 %v2868, %v2980
    %v2982 = vpop.f32.mrf.mxu0
    %v2983 = vadd.f32 %v2870, %v2982
    %v2984 = vpop.f32.mrf.mxu0
    %v2985 = vadd.f32 %v2872, %v2984
    %2986 = vmatprep.mubr.bf16.mxu0 %v2398
    %2987 = vmatmul.mubr.bf16.gmra.mxu0 %v2397
    %v2988 = vpop.f32.mrf.mxu0
    %v2989 = vadd.f32 %v2876, %v2988
    %v2990 = vpop.f32.mrf.mxu0
    %v2991 = vadd.f32 %v2878, %v2990
    %v2992 = vpop.f32.mrf.mxu0
    %v2993 = vadd.f32 %v2880, %v2992
    %v2994 = vpop.f32.mrf.mxu0
    %v2995 = vadd.f32 %v2882, %v2994
    %2996 = vmatprep.mubr.bf16.mxu0 %v2402
    %2997 = vmatmul.mubr.bf16.gmra.mxu0 %v2401
    %v2998 = vpop.f32.mrf.mxu0
    %v2999 = vadd.f32 %v2886, %v2998
    %v3000 = vpop.f32.mrf.mxu0
    %v3001 = vadd.f32 %v2888, %v3000
    %v3002 = vpop.f32.mrf.mxu0
    %v3003 = vadd.f32 %v2890, %v3002
    %v3004 = vpop.f32.mrf.mxu0
    %v3005 = vadd.f32 %v2892, %v3004
    %3006 = vmatprep.mubr.bf16.mxu0 %v2406
    %3007 = vmatmul.mubr.bf16.gmra.mxu0 %v2405
    %v3008 = vpop.f32.mrf.mxu0
    %v3009 = vadd.f32 %v2896, %v3008
    %v3010 = vpop.f32.mrf.mxu0
    %v3011 = vadd.f32 %v2898, %v3010
    %v3012 = vpop.f32.mrf.mxu0
    %v3013 = vadd.f32 %v2900, %v3012
    %v3014 = vpop.f32.mrf.mxu0
    %v3015 = vadd.f32 %v2902, %v3014
    %3016 = vmatprep.mubr.bf16.mxu0 %v2410
    %3017 = vmatmul.mubr.bf16.gmra.mxu0 %v2409
    %v3018 = vpop.f32.mrf.mxu0
    %v3019 = vadd.f32 %v2906, %v3018
    %v3020 = vpop.f32.mrf.mxu0
    %v3021 = vadd.f32 %v2908, %v3020
    %v3022 = vpop.f32.mrf.mxu0
    %v3023 = vadd.f32 %v2910, %v3022
    %v3024 = vpop.f32.mrf.mxu0
    %v3025 = vadd.f32 %v2912, %v3024
    %3026 = vmatprep.mubr.bf16.mxu0 %v2414
    %3027 = vmatmul.mubr.bf16.gmra.mxu0 %v2413
    %v3028 = vpop.f32.mrf.mxu0
    %v3029 = vadd.f32 %v2916, %v3028
    %v3030 = vpop.f32.mrf.mxu0
    %v3031 = vadd.f32 %v2918, %v3030
    %v3032 = vpop.f32.mrf.mxu0
    %v3033 = vadd.f32 %v2920, %v3032
    %v3034 = vpop.f32.mrf.mxu0
    %v3035 = vadd.f32 %v2922, %v3034
    %3036 = vdwg.mxu0
    %v3037 = vpack.c.bf16 %v2963, %v2959
    %v3038 = vpack.c.bf16 %v2965, %v2961
    %v3039 = vpack.c.bf16 %v2973, %v2969
    %v3040 = vpack.c.bf16 %v2975, %v2971
    %v3041 = vpack.c.bf16 %v2983, %v2979
    %v3042 = vpack.c.bf16 %v2985, %v2981
    %v3043 = vpack.c.bf16 %v2993, %v2989
    %v3044 = vpack.c.bf16 %v2995, %v2991
    %v3045 = vpack.c.bf16 %v3003, %v2999
    %v3046 = vpack.c.bf16 %v3005, %v3001
    %v3047 = vpack.c.bf16 %v3013, %v3009
    %v3048 = vpack.c.bf16 %v3015, %v3011
    %v3049 = vpack.c.bf16 %v3023, %v3019
    %v3050 = vpack.c.bf16 %v3025, %v3021
    %v3051 = vpack.c.bf16 %v3033, %v3029
    %v3052 = vpack.c.bf16 %v3035, %v3031
    %v3053 = vmax.bf16 %v3037, 0
    %v3054 = vmax.bf16 %v3038, 0
    %v3055 = vmax.bf16 %v3039, 0
    %v3056 = vmax.bf16 %v3040, 0
    %v3057 = vmax.bf16 %v3041, 0
    %v3058 = vmax.bf16 %v3042, 0
    %v3059 = vmax.bf16 %v3043, 0
    %v3060 = vmax.bf16 %v3044, 0
    %v3061 = vmax.bf16 %v3045, 0
    %v3062 = vmax.bf16 %v3046, 0
    %v3063 = vmax.bf16 %v3047, 0
    %v3064 = vmax.bf16 %v3048, 0
    %v3065 = vmax.bf16 %v3049, 0
    %v3066 = vmax.bf16 %v3050, 0
    %v3067 = vmax.bf16 %v3051, 0
    %v3068 = vmax.bf16 %v3052, 0
    %v3069 = vld [vmem:[#allocation5] sm:$0xf]
    %v3070 = vld [vmem:[#allocation5 + $0x4] sm:$0xf]
    %v3071 = vld [vmem:[#allocation5 + $0x8] sm:$0xf]
    %v3072 = vld [vmem:[#allocation5 + $0xc] sm:$0xf]
    %v3073 = vld [vmem:[#allocation5 + $0x10] sm:$0xf]
    %v3074 = vld [vmem:[#allocation5 + $0x14] sm:$0xf]
    %v3075 = vld [vmem:[#allocation5 + $0x18] sm:$0xf]
    %v3076 = vld [vmem:[#allocation5 + $0x1c] sm:$0xf]
    %v3077 = vld [vmem:[#allocation5 + $0x20] sm:$0xf]
    %v3078 = vld [vmem:[#allocation5 + $0x24] sm:$0xf]
    %v3079 = vld [vmem:[#allocation5 + $0x28] sm:$0xf]
    %v3080 = vld [vmem:[#allocation5 + $0x2c] sm:$0xf]
    %v3081 = vld [vmem:[#allocation5 + $0x30] sm:$0xf]
    %v3082 = vld [vmem:[#allocation5 + $0x34] sm:$0xf]
    %v3083 = vld [vmem:[#allocation5 + $0x38] sm:$0xf]
    %v3084 = vld [vmem:[#allocation5 + $0x3c] sm:$0xf]
    %v3085 = vld [vmem:[#allocation5 + $0x40] sm:$0xf]
    %v3086 = vld [vmem:[#allocation5 + $0x44] sm:$0xf]
    %v3087 = vld [vmem:[#allocation5 + $0x48] sm:$0xf]
    %v3088 = vld [vmem:[#allocation5 + $0x4c] sm:$0xf]
    %v3089 = vld [vmem:[#allocation5 + $0x50] sm:$0xf]
    %v3090 = vld [vmem:[#allocation5 + $0x54] sm:$0xf]
    %v3091 = vld [vmem:[#allocation5 + $0x58] sm:$0xf]
    %v3092 = vld [vmem:[#allocation5 + $0x5c] sm:$0xf]
    %v3093 = vld [vmem:[#allocation5 + $0x60] sm:$0xf]
    %v3094 = vld [vmem:[#allocation5 + $0x64] sm:$0xf]
    %v3095 = vld [vmem:[#allocation5 + $0x68] sm:$0xf]
    %v3096 = vld [vmem:[#allocation5 + $0x6c] sm:$0xf]
    %v3097 = vld [vmem:[#allocation5 + $0x70] sm:$0xf]
    %v3098 = vld [vmem:[#allocation5 + $0x74] sm:$0xf]
    %v3099 = vld [vmem:[#allocation5 + $0x78] sm:$0xf]
    %v3100 = vld [vmem:[#allocation5 + $0x7c] sm:$0xf]
    %v3101 = vld [vmem:[%s6] sm:$0x1]
    %v3103 = vlaneseq
    %v3104 = vshrl.u32 %v3103, 7
    %v3105 = vsub.s32 0, %v3104
    %v3106 = vrot.slane %v3101, %v3105
    %v3140 = vunpack.c.l.b16 %v3069
    %v3141 = vunpack.c.l.b16 %v3070
    %v3142 = vunpack.c.l.b16 %v3071
    %v3143 = vunpack.c.l.b16 %v3072
    %v3144 = vunpack.c.l.b16 %v3073
    %v3145 = vunpack.c.l.b16 %v3074
    %v3146 = vunpack.c.l.b16 %v3075
    %v3147 = vunpack.c.l.b16 %v3076
    %v3148 = vunpack.c.l.b16 %v3077
    %v3149 = vunpack.c.l.b16 %v3078
    %v3150 = vunpack.c.l.b16 %v3079
    %v3151 = vunpack.c.l.b16 %v3080
    %v3152 = vunpack.c.l.b16 %v3081
    %v3153 = vunpack.c.l.b16 %v3082
    %v3154 = vunpack.c.l.b16 %v3083
    %v3155 = vunpack.c.l.b16 %v3084
    %v3156 = vunpack.c.l.b16 %v3085
    %v3157 = vunpack.c.l.b16 %v3086
    %v3158 = vunpack.c.l.b16 %v3087
    %v3159 = vunpack.c.l.b16 %v3088
    %v3160 = vunpack.c.l.b16 %v3089
    %v3161 = vunpack.c.l.b16 %v3090
    %v3162 = vunpack.c.l.b16 %v3091
    %v3163 = vunpack.c.l.b16 %v3092
    %v3164 = vunpack.c.l.b16 %v3093
    %v3165 = vunpack.c.l.b16 %v3094
    %v3166 = vunpack.c.l.b16 %v3095
    %v3167 = vunpack.c.l.b16 %v3096
    %v3168 = vunpack.c.l.b16 %v3097
    %v3169 = vunpack.c.l.b16 %v3098
    %v3170 = vunpack.c.l.b16 %v3099
    %v3171 = vunpack.c.l.b16 %v3100
    %v3172 = vpack.c.b16 %v3141, %v3140
    %v3173 = vpack.c.b16 %v3143, %v3142
    %v3174 = vpack.c.b16 %v3145, %v3144
    %v3175 = vpack.c.b16 %v3147, %v3146
    %v3176 = vpack.c.b16 %v3149, %v3148
    %v3177 = vpack.c.b16 %v3151, %v3150
    %v3178 = vpack.c.b16 %v3153, %v3152
    %v3179 = vpack.c.b16 %v3155, %v3154
    %v3180 = vpack.c.b16 %v3157, %v3156
    %v3181 = vpack.c.b16 %v3159, %v3158
    %v3182 = vpack.c.b16 %v3161, %v3160
    %v3183 = vpack.c.b16 %v3163, %v3162
    %v3184 = vpack.c.b16 %v3165, %v3164
    %v3185 = vpack.c.b16 %v3167, %v3166
    %v3186 = vpack.c.b16 %v3169, %v3168
    %v3187 = vpack.c.b16 %v3171, %v3170
    %3204 = vmatprep.subr.bf16.mxu0 0
    %3205 = vmatpush1.bf16.msra.mxu0 %v3179
    %3206 = vmatprep.subr.bf16.mxu0 0
    %3207 = vmatpush1.bf16.msra.mxu0 %v3178
    %3208 = vmatprep.subr.bf16.mxu0 0
    %3209 = vmatpush1.bf16.msra.mxu0 %v3177
    %3210 = vmatprep.subr.bf16.mxu0 0
    %3211 = vmatpush1.bf16.msra.mxu0 %v3176
    %3212 = vmatprep.subr.bf16.mxu0 0
    %3213 = vmatpush1.bf16.msra.mxu0 %v3175
    %3214 = vmatprep.subr.bf16.mxu0 0
    %3215 = vmatpush1.bf16.msra.mxu0 %v3174
    %3216 = vmatprep.subr.bf16.mxu0 0
    %3217 = vmatpush1.bf16.msra.mxu0 %v3173
    %3218 = vmatprep.subr.bf16.mxu0 0
    %3219 = vmatpush1.bf16.msra.mxu0 %v3172
    %3220 = vmatprep.subr.bf16.mxu0 0
    %3221 = vmatpush2.bf16.msra.mxu0 %v3187
    %3222 = vmatprep.subr.bf16.mxu0 0
    %3223 = vmatpush2.bf16.msra.mxu0 %v3186
    %3224 = vmatprep.subr.bf16.mxu0 0
    %3225 = vmatpush2.bf16.msra.mxu0 %v3185
    %3226 = vmatprep.subr.bf16.mxu0 0
    %3227 = vmatpush2.bf16.msra.mxu0 %v3184
    %3228 = vmatprep.subr.bf16.mxu0 0
    %3229 = vmatpush2.bf16.msra.mxu0 %v3183
    %3230 = vmatprep.subr.bf16.mxu0 0
    %3231 = vmatpush2.bf16.msra.mxu0 %v3182
    %3232 = vmatprep.subr.bf16.mxu0 0
    %3233 = vmatpush2.bf16.msra.mxu0 %v3181
    %3234 = vmatprep.subr.bf16.mxu0 0
    %3235 = vmatpush2.bf16.msra.mxu0 %v3180
    %3236 = vmatprep.mubr.bf16.mxu0 %v3054
    %3237 = vmatmul.mubr.bf16.gmra.mxu0 %v3053
    %v3238 = vpop.f32.mrf.mxu0
    %v3239 = vadd.f32 %v3106, %v3238
    %v3240 = vpop.f32.mrf.mxu0
    %v3241 = vpop.f32.mrf.mxu0
    %v3242 = vadd.f32 %v3106, %v3241
    %v3243 = vpop.f32.mrf.mxu0
    %3244 = vmatprep.mubr.bf16.mxu0 %v3056
    %3245 = vmatmul.mubr.bf16.gmra.mxu0 %v3055
    %v3246 = vpop.f32.mrf.mxu0
    %v3247 = vadd.f32 %v3106, %v3246
    %v3248 = vpop.f32.mrf.mxu0
    %v3249 = vpop.f32.mrf.mxu0
    %v3250 = vadd.f32 %v3106, %v3249
    %v3251 = vpop.f32.mrf.mxu0
    %3252 = vmatprep.mubr.bf16.mxu0 %v3058
    %3253 = vmatmul.mubr.bf16.gmra.mxu0 %v3057
    %v3254 = vpop.f32.mrf.mxu0
    %v3255 = vadd.f32 %v3106, %v3254
    %v3256 = vpop.f32.mrf.mxu0
    %v3257 = vpop.f32.mrf.mxu0
    %v3258 = vadd.f32 %v3106, %v3257
    %v3259 = vpop.f32.mrf.mxu0
    %3260 = vmatprep.mubr.bf16.mxu0 %v3060
    %3261 = vmatmul.mubr.bf16.gmra.mxu0 %v3059
    %v3262 = vpop.f32.mrf.mxu0
    %v3263 = vadd.f32 %v3106, %v3262
    %v3264 = vpop.f32.mrf.mxu0
    %v3265 = vpop.f32.mrf.mxu0
    %v3266 = vadd.f32 %v3106, %v3265
    %v3267 = vpop.f32.mrf.mxu0
    %3268 = vmatprep.mubr.bf16.mxu0 %v3062
    %3269 = vmatmul.mubr.bf16.gmra.mxu0 %v3061
    %v3270 = vpop.f32.mrf.mxu0
    %v3271 = vadd.f32 %v3106, %v3270
    %v3272 = vpop.f32.mrf.mxu0
    %v3273 = vpop.f32.mrf.mxu0
    %v3274 = vadd.f32 %v3106, %v3273
    %v3275 = vpop.f32.mrf.mxu0
    %3276 = vmatprep.mubr.bf16.mxu0 %v3064
    %3277 = vmatmul.mubr.bf16.gmra.mxu0 %v3063
    %v3278 = vpop.f32.mrf.mxu0
    %v3279 = vadd.f32 %v3106, %v3278
    %v3280 = vpop.f32.mrf.mxu0
    %v3281 = vpop.f32.mrf.mxu0
    %v3282 = vadd.f32 %v3106, %v3281
    %v3283 = vpop.f32.mrf.mxu0
    %3284 = vmatprep.mubr.bf16.mxu0 %v3066
    %3285 = vmatmul.mubr.bf16.gmra.mxu0 %v3065
    %v3286 = vpop.f32.mrf.mxu0
    %v3287 = vadd.f32 %v3106, %v3286
    %v3288 = vpop.f32.mrf.mxu0
    %v3289 = vpop.f32.mrf.mxu0
    %v3290 = vadd.f32 %v3106, %v3289
    %v3291 = vpop.f32.mrf.mxu0
    %3292 = vmatprep.mubr.bf16.mxu0 %v3068
    %3293 = vmatmul.mubr.bf16.gmra.mxu0 %v3067
    %v3294 = vpop.f32.mrf.mxu0
    %v3295 = vadd.f32 %v3106, %v3294
    %v3296 = vpop.f32.mrf.mxu0
    %v3297 = vpop.f32.mrf.mxu0
    %v3298 = vadd.f32 %v3106, %v3297
    %v3299 = vpop.f32.mrf.mxu0
    %3300 = vdwg.mxu0
    %3301 = vst [vmem:[#allocation7] sm:$0xff] %v3239
    %3302 = vst [vmem:[#allocation7 + $0x8] sm:$0xff] %v3242
    %3303 = vst [vmem:[#allocation7 + $0x10] sm:$0xff] %v3247
    %3304 = vst [vmem:[#allocation7 + $0x18] sm:$0xff] %v3250
    %3305 = vst [vmem:[#allocation7 + $0x20] sm:$0xff] %v3255
    %3306 = vst [vmem:[#allocation7 + $0x28] sm:$0xff] %v3258
    %3307 = vst [vmem:[#allocation7 + $0x30] sm:$0xff] %v3263
    %3308 = vst [vmem:[#allocation7 + $0x38] sm:$0xff] %v3266
    %3309 = vst [vmem:[#allocation7 + $0x40] sm:$0xff] %v3271
    %3310 = vst [vmem:[#allocation7 + $0x48] sm:$0xff] %v3274
    %3311 = vst [vmem:[#allocation7 + $0x50] sm:$0xff] %v3279
    %3312 = vst [vmem:[#allocation7 + $0x58] sm:$0xff] %v3282
    %3313 = vst [vmem:[#allocation7 + $0x60] sm:$0xff] %v3287
    %3314 = vst [vmem:[#allocation7 + $0x68] sm:$0xff] %v3290
    %3315 = vst [vmem:[#allocation7 + $0x70] sm:$0xff] %v3295
    %3316 = vst [vmem:[#allocation7 + $0x78] sm:$0xff] %v3298
    // Predicated region
    $region38: #{tpu_custom_call.1} parent=1 // pred_check
      _
    $region39: #{tpu_custom_call.1} parent=1 // pred_check_branch
      %3318 = sbr.rel (0) target = $region41
    $region40: #{tpu_custom_call.1} parent=1 // pred_region
      %s3320 = ssub.s32 2048, 2048
      %3321 = vsyncadd [#allocation4], %s3320
      %s3322 = sshll.u32 [#allocation7], 4
      %s3323 = int_to_ptr.vmem [resolvable:$true] %s3322
      %3328 = dma.vmem_to_hbm [thread:$0]  %s3323, 2048, %s7, [#allocation4], 128, 128, 8
    $region41: #{tpu_custom_call.1} parent=1 // pred_fallthru
      _
    // Predicated region
    $region42: #{tpu_custom_call.1} parent=1 // pred_check
      _
    $region43: #{tpu_custom_call.1} parent=1 // pred_check_branch
      %3330 = sbr.rel (0) target = $region45
    $region44: #{tpu_custom_call.1} parent=1 // pred_region
      %3331 = dma.done [#allocation4], 2048
    $region45: #{tpu_custom_call.1} parent=1 // pred_fallthru
      _
    %3332 = vsyncpa [#allocation3], 1
    %3333 = vsyncpa [#allocation6], 1
    %3334 = vsyncpa [#allocation4], 1

</llo_original>
